<compile_context>
chip_gen: v6e
topology: v6e:2x2x1
jax: 0.10.0
libtpu: 0.0.40
codegen_flags: <defaults>
</compile_context>

<pallas_src>
import functools

import jax
import jax.numpy as jnp
from jax import lax
from jax.experimental import pallas as pl
from jax.experimental.pallas import tpu as pltpu

EPS = 1e-5


def _im2col_3x3(x2d, cols_ref, *, H, W):
    """Scatter the 9 shifted/masked taps of x2d (C, H*W) into cols_ref (9C, H*W).

    Tap k = ky*3+kx holds x[c, h+ky-1, w+kx-1] (zero outside the image) at
    flattened position p = h*W + w, i.e. a static lane shift by
    s = (ky-1)*W + (kx-1) plus a width-border mask.
    """
    C, HW = x2d.shape
    lane = lax.broadcasted_iota(jnp.int32, (C, HW), 1)
    wpos = lane % W  # destination column coordinate

    # Zero once; the lane ranges left unwritten per tap are exactly the
    # height-border (source row out of range) positions, which must be zero.
    cols_ref[...] = jnp.zeros(cols_ref.shape, cols_ref.dtype)

    for ky in range(3):
        for kx in range(3):
            k = ky * 3 + kx
            s = (ky - 1) * W + (kx - 1)
            if s > 0:
                dst = slice(0, HW - s)
                val = x2d[:, s:]
            elif s < 0:
                dst = slice(-s, HW)
                val = x2d[:, :HW + s]
            else:
                dst = slice(0, HW)
                val = x2d
            if kx == 0:      # source column w-1 must be >= 0
                val = jnp.where(wpos[:, dst] >= 1, val, 0.0)
            elif kx == 2:    # source column w+1 must be <= W-1
                val = jnp.where(wpos[:, dst] <= W - 2, val, 0.0)
            cols_ref[k * C:(k + 1) * C, dst] = val


def _conv1_kernel(x_ref, w_ref, y_ref, ssum_ref, ssq_ref, cols_ref, *, H, W):
    x = x_ref[0]                                              # (C, HW) f32
    _im2col_3x3(x, cols_ref, H=H, W=W)
    y = jnp.dot(w_ref[...], cols_ref[...], preferred_element_type=jnp.float32)
    y_ref[0] = y
    ssum_ref[0] = jnp.sum(y, axis=1, keepdims=True)
    ssq_ref[0] = jnp.sum(y * y, axis=1, keepdims=True)


def _bn_relu_conv2_kernel(y1_ref, scale_ref, shift_ref, w_ref,
                          y_ref, ssum_ref, ssq_ref, cols_ref, *, H, W):
    # fused BN1 (precomputed scale/shift) + ReLU, then conv2
    h = jnp.maximum(y1_ref[0] * scale_ref[...] + shift_ref[...], 0.0)
    _im2col_3x3(h, cols_ref, H=H, W=W)
    y = jnp.dot(w_ref[...], cols_ref[...], preferred_element_type=jnp.float32)
    y_ref[0] = y
    ssum_ref[0] = jnp.sum(y, axis=1, keepdims=True)
    ssq_ref[0] = jnp.sum(y * y, axis=1, keepdims=True)


def _bn_add_relu_kernel(y2_ref, x_ref, scale_ref, shift_ref, o_ref):
    out = jnp.maximum(y2_ref[0] * scale_ref[...] + shift_ref[...] + x_ref[0], 0.0)
    o_ref[0] = out.astype(o_ref.dtype)


def _pack_weights(w_oihw):
    """OIHW (O, I, 3, 3) -> (O, 9*I) with column index (ky*3+kx)*I + i."""
    O, I, KH, KW = w_oihw.shape
    return jnp.transpose(w_oihw, (0, 2, 3, 1)).reshape(O, KH * KW * I).astype(jnp.float32)


def _compiler_params():
    return pltpu.CompilerParams(dimension_semantics=("parallel",),
                                vmem_limit_bytes=32 * 1024 * 1024)


def _scale_shift(ssum, ssq, gamma, beta, count):
    """Exact training-mode BN stats from per-image partial sums -> fused scale/shift."""
    s = jnp.sum(ssum[:, :, 0], axis=0)
    q = jnp.sum(ssq[:, :, 0], axis=0)
    mean = s / count
    var = q / count - mean * mean            # biased variance (BN training mode)
    scale = gamma * lax.rsqrt(var + EPS)
    shift = beta - mean * scale
    C = scale.shape[0]
    return (scale.reshape(C, 1).astype(jnp.float32),
            shift.reshape(C, 1).astype(jnp.float32))


def residual_block(x_nchw, w1_oihw, w2_oihw, g1, b1, g2, b2):
    """Forward pass of the PyTorch ResidualBlock. x_nchw: (N, C, H, W) f32."""
    N, C, H, W = x_nchw.shape
    HW = H * W
    x2 = x_nchw.reshape(N, C, HW).astype(jnp.float32)
    wp1 = _pack_weights(w1_oihw)
    wp2 = _pack_weights(w2_oihw)

    act_spec = pl.BlockSpec((1, C, HW), lambda n: (n, 0, 0))
    wgt_spec = pl.BlockSpec((C, 9 * C), lambda n: (0, 0))
    vec_spec = pl.BlockSpec((C, 1), lambda n: (0, 0))
    stat_spec = pl.BlockSpec((1, C, 1), lambda n: (n, 0, 0))
    act_shape = jax.ShapeDtypeStruct((N, C, HW), jnp.float32)
    stat_shape = jax.ShapeDtypeStruct((N, C, 1), jnp.float32)
    cols_scratch = pltpu.VMEM((9 * C, HW), jnp.float32)

    # --- conv1 (+ per-image BN1 partial stats) ------------------------------
    y1, ssum1, ssq1 = pl.pallas_call(
        functools.partial(_conv1_kernel, H=H, W=W),
        grid=(N,),
        in_specs=[act_spec, wgt_spec],
        out_specs=(act_spec, stat_spec, stat_spec),
        out_shape=(act_shape, stat_shape, stat_shape),
        scratch_shapes=[cols_scratch],
        compiler_params=_compiler_params(),
    )(x2, wp1)

    count = float(N * HW)
    scale1, shift1 = _scale_shift(ssum1, ssq1, g1, b1, count)

    # --- BN1 + ReLU + conv2 (+ per-image BN2 partial stats) -----------------
    y2, ssum2, ssq2 = pl.pallas_call(
        functools.partial(_bn_relu_conv2_kernel, H=H, W=W),
        grid=(N,),
        in_specs=[act_spec, vec_spec, vec_spec, wgt_spec],
        out_specs=(act_spec, stat_spec, stat_spec),
        out_shape=(act_shape, stat_shape, stat_shape),
        scratch_shapes=[cols_scratch],
        compiler_params=_compiler_params(),
    )(y1, scale1, shift1, wp2)

    scale2, shift2 = _scale_shift(ssum2, ssq2, g2, b2, count)

    # --- BN2 + residual add + ReLU -------------------------------------------
    out = pl.pallas_call(
        _bn_add_relu_kernel,
        grid=(N,),
        in_specs=[act_spec, act_spec, vec_spec, vec_spec],
        out_specs=act_spec,
        out_shape=jax.ShapeDtypeStruct((N, C, HW), jnp.float32),
        compiler_params=_compiler_params(),
    )(y2, x2, scale2, shift2)

    return out.reshape(N, C, H, W)


def residual_block_reference(x_nchw, w1_oihw, w2_oihw, g1, b1, g2, b2):
    """Pure-JAX reference matching the PyTorch forward (NCHW, train-mode BN)."""
    def conv(x, w):
        return lax.conv_general_dilated(
            x, w, window_strides=(1, 1), padding=((1, 1), (1, 1)),
            dimension_numbers=('NCHW', 'OIHW', 'NCHW'))

    def bn(x, g, b):
        mean = jnp.mean(x, axis=(0, 2, 3), keepdims=True)
        var = jnp.mean((x - mean) ** 2, axis=(0, 2, 3), keepdims=True)
        return ((x - mean) * lax.rsqrt(var + EPS) * g.reshape(1, -1, 1, 1)
                + b.reshape(1, -1, 1, 1))

    out = jnp.maximum(bn(conv(x_nchw, w1_oihw), g1, b1), 0.0)
    out = bn(conv(out, w2_oihw), g2, b2)
    return jnp.maximum(out + x_nchw, 0.0)


if __name__ == "__main__":
    N, C, H, W = 2, 4, 16, 16

    key = jax.random.PRNGKey(0)
    kx, kw1, kw2, kg1, kb1, kg2, kb2 = jax.random.split(key, 7)

    x = jax.random.normal(kx, (N, C, H, W), dtype=jnp.float32)
    w1 = jax.random.normal(kw1, (C, C, 3, 3), dtype=jnp.float32) * 0.1
    w2 = jax.random.normal(kw2, (C, C, 3, 3), dtype=jnp.float32) * 0.1
    g1 = 1.0 + 0.1 * jax.random.normal(kg1, (C,), dtype=jnp.float32)
    b1 = 0.1 * jax.random.normal(kb1, (C,), dtype=jnp.float32)
    g2 = 1.0 + 0.1 * jax.random.normal(kg2, (C,), dtype=jnp.float32)
    b2 = 0.1 * jax.random.normal(kb2, (C,), dtype=jnp.float32)

    run = jax.jit(residual_block)
    out = jax.block_until_ready(run(x, w1, w2, g1, b1, g2, b2))

    ref = residual_block_reference(x, w1, w2, g1, b1, g2, b2)
    assert out.shape == ref.shape == (N, C, H, W)
    max_err = float(jnp.max(jnp.abs(out - ref)))
    assert jnp.allclose(out, ref, atol=1e-3, rtol=1e-3), max_err

    print("KERNEL_OK")
</pallas_src>

<mosaic_0001>
module attributes {stable_mosaic.version = 11 : i64} {
  func.func @_conv1_kernel(%arg0: i32, %arg1: memref<1x4x256xf32, #tpu.memory_space<vmem>>, %arg2: memref<4x36xf32, #tpu.memory_space<vmem>>, %arg3: memref<1x4x256xf32, #tpu.memory_space<vmem>>, %arg4: memref<1x4x1xf32, #tpu.memory_space<vmem>>, %arg5: memref<1x4x1xf32, #tpu.memory_space<vmem>>, %arg6: memref<36x256xf32, #tpu.memory_space<vmem>>) attributes {dimension_semantics = [#tpu.dimension_semantics<parallel>], iteration_bounds = array<i64: 2>, scalar_prefetch = 0 : i64, scratch_operands = 1 : i64, tpu.core_type = #tpu.core_type<tc>, window_params = [{transform_indices = @transform_0, window_bounds = array<i64: 1, 4, 256>}, {pipeline_mode = #tpu.pipeline_mode<synchronous>, transform_indices = @transform_1, window_bounds = array<i64: 4, 36>}, {transform_indices = @transform_2, window_bounds = array<i64: 1, 4, 256>}, {transform_indices = @transform_3, window_bounds = array<i64: 1, 4, 1>}, {transform_indices = @transform_4, window_bounds = array<i64: 1, 4, 1>}]} {
    %c0 = arith.constant 0 : index
    %c0_0 = arith.constant 0 : index
    %c0_1 = arith.constant 0 : index
    %0 = vector.load %arg1[%c0, %c0_0, %c0_1] : memref<1x4x256xf32, #tpu.memory_space<vmem>>, vector<1x4x256xf32>
    %1 = vector.shape_cast %0 : vector<1x4x256xf32> to vector<4x256xf32>
    %2 = tpu.iota {dimensions = array<i32: 1>} : vector<4x256xi32>
    %c16_i32 = arith.constant 16 : i32
    %c0_i32 = arith.constant 0 : i32
    %3 = arith.cmpi eq, %c16_i32, %c0_i32 : i32
    %c1_i32 = arith.constant 1 : i32
    %4 = arith.select %3, %c1_i32, %c16_i32 : i32
    %5 = vector.broadcast %4 : i32 to vector<4x256xi32>
    %6 = arith.remsi %2, %5 : vector<4x256xi32>
    %c0_i32_2 = arith.constant 0 : i32
    %7 = vector.broadcast %c0_i32_2 : i32 to vector<4x256xi32>
    %8 = arith.cmpi ne, %6, %7 : vector<4x256xi32>
    %c0_i32_3 = arith.constant 0 : i32
    %9 = vector.broadcast %c0_i32_3 : i32 to vector<4x256xi32>
    %10 = arith.cmpi slt, %6, %9 : vector<4x256xi32>
    %c0_i32_4 = arith.constant 0 : i32
    %11 = arith.cmpi slt, %4, %c0_i32_4 : i32
    %12 = vector.broadcast %11 : i1 to vector<4x256xi1>
    %13 = vector.broadcast %12 : vector<4x256xi1> to vector<4x256xi1>
    %14 = arith.xori %10, %13 : vector<4x256xi1>
    %15 = arith.andi %14, %8 : vector<4x256xi1>
    %16 = vector.broadcast %4 : i32 to vector<4x256xi32>
    %17 = arith.addi %6, %16 : vector<4x256xi32>
    %18 = arith.select %15, %17, %6 : vector<4x256xi1>, vector<4x256xi32>
    %cst = arith.constant 0.000000e+00 : f32
    %19 = vector.broadcast %cst : f32 to vector<36x256xf32>
    %c0_5 = arith.constant 0 : index
    %c0_6 = arith.constant 0 : index
    %20 = vector.load %arg6[%c0_5, %c0_6] : memref<36x256xf32, #tpu.memory_space<vmem>>, vector<36x256xf32>
    tpu.vector_store %arg6[%c0_5, %c0_6], %19 {strides = array<i32>} : memref<36x256xf32, #tpu.memory_space<vmem>>, vector<36x256xf32>,
    %21 = vector.extract_strided_slice %1 {offsets = [0, 0], sizes = [4, 239], strides = [1, 1]} : vector<4x256xf32> to vector<4x239xf32>
    %22 = vector.extract_strided_slice %18 {offsets = [0, 17], sizes = [4, 239], strides = [1, 1]} : vector<4x256xi32> to vector<4x239xi32>
    %c1_i32_7 = arith.constant 1 : i32
    %23 = vector.broadcast %c1_i32_7 : i32 to vector<4x239xi32>
    %24 = arith.cmpi sge, %22, %23 : vector<4x239xi32>
    %cst_8 = arith.constant 0.000000e+00 : f32
    %25 = vector.broadcast %cst_8 : f32 to vector<4x239xf32>
    %26 = arith.select %24, %21, %25 : vector<4x239xi1>, vector<4x239xf32>
    %c0_9 = arith.constant 0 : index
    %c17 = arith.constant 17 : index
    %27 = vector.load %arg6[%c0_9, %c17] : memref<36x256xf32, #tpu.memory_space<vmem>>, vector<4x239xf32>
    tpu.vector_store %arg6[%c0_9, %c17], %26 {strides = array<i32>} : memref<36x256xf32, #tpu.memory_space<vmem>>, vector<4x239xf32>,
    %28 = vector.extract_strided_slice %1 {offsets = [0, 0], sizes = [4, 240], strides = [1, 1]} : vector<4x256xf32> to vector<4x240xf32>
    %c4 = arith.constant 4 : index
    %c16 = arith.constant 16 : index
    %29 = vector.load %arg6[%c4, %c16] : memref<36x256xf32, #tpu.memory_space<vmem>>, vector<4x240xf32>
    tpu.vector_store %arg6[%c4, %c16], %28 {strides = array<i32>} : memref<36x256xf32, #tpu.memory_space<vmem>>, vector<4x240xf32>,
    %30 = vector.extract_strided_slice %1 {offsets = [0, 0], sizes = [4, 241], strides = [1, 1]} : vector<4x256xf32> to vector<4x241xf32>
    %31 = vector.extract_strided_slice %18 {offsets = [0, 15], sizes = [4, 241], strides = [1, 1]} : vector<4x256xi32> to vector<4x241xi32>
    %c14_i32 = arith.constant 14 : i32
    %32 = vector.broadcast %c14_i32 : i32 to vector<4x241xi32>
    %33 = arith.cmpi sle, %31, %32 : vector<4x241xi32>
    %cst_10 = arith.constant 0.000000e+00 : f32
    %34 = vector.broadcast %cst_10 : f32 to vector<4x241xf32>
    %35 = arith.select %33, %30, %34 : vector<4x241xi1>, vector<4x241xf32>
    %c8 = arith.constant 8 : index
    %c15 = arith.constant 15 : index
    %36 = vector.load %arg6[%c8, %c15] : memref<36x256xf32, #tpu.memory_space<vmem>>, vector<4x241xf32>
    tpu.vector_store %arg6[%c8, %c15], %35 {strides = array<i32>} : memref<36x256xf32, #tpu.memory_space<vmem>>, vector<4x241xf32>,
    %37 = vector.extract_strided_slice %1 {offsets = [0, 0], sizes = [4, 255], strides = [1, 1]} : vector<4x256xf32> to vector<4x255xf32>
    %38 = vector.extract_strided_slice %18 {offsets = [0, 1], sizes = [4, 255], strides = [1, 1]} : vector<4x256xi32> to vector<4x255xi32>
    %c1_i32_11 = arith.constant 1 : i32
    %39 = vector.broadcast %c1_i32_11 : i32 to vector<4x255xi32>
    %40 = arith.cmpi sge, %38, %39 : vector<4x255xi32>
    %cst_12 = arith.constant 0.000000e+00 : f32
    %41 = vector.broadcast %cst_12 : f32 to vector<4x255xf32>
    %42 = arith.select %40, %37, %41 : vector<4x255xi1>, vector<4x255xf32>
    %c12 = arith.constant 12 : index
    %c1 = arith.constant 1 : index
    %43 = vector.load %arg6[%c12, %c1] : memref<36x256xf32, #tpu.memory_space<vmem>>, vector<4x255xf32>
    tpu.vector_store %arg6[%c12, %c1], %42 {strides = array<i32>} : memref<36x256xf32, #tpu.memory_space<vmem>>, vector<4x255xf32>,
    %c16_13 = arith.constant 16 : index
    %c0_14 = arith.constant 0 : index
    %44 = vector.load %arg6[%c16_13, %c0_14] : memref<36x256xf32, #tpu.memory_space<vmem>>, vector<4x256xf32>
    tpu.vector_store %arg6[%c16_13, %c0_14], %1 {strides = array<i32>} : memref<36x256xf32, #tpu.memory_space<vmem>>, vector<4x256xf32>,
    %45 = vector.extract_strided_slice %1 {offsets = [0, 1], sizes = [4, 255], strides = [1, 1]} : vector<4x256xf32> to vector<4x255xf32>
    %46 = vector.extract_strided_slice %18 {offsets = [0, 0], sizes = [4, 255], strides = [1, 1]} : vector<4x256xi32> to vector<4x255xi32>
    %c14_i32_15 = arith.constant 14 : i32
    %47 = vector.broadcast %c14_i32_15 : i32 to vector<4x255xi32>
    %48 = arith.cmpi sle, %46, %47 : vector<4x255xi32>
    %cst_16 = arith.constant 0.000000e+00 : f32
    %49 = vector.broadcast %cst_16 : f32 to vector<4x255xf32>
    %50 = arith.select %48, %45, %49 : vector<4x255xi1>, vector<4x255xf32>
    %c20 = arith.constant 20 : index
    %c0_17 = arith.constant 0 : index
    %51 = vector.load %arg6[%c20, %c0_17] : memref<36x256xf32, #tpu.memory_space<vmem>>, vector<4x255xf32>
    tpu.vector_store %arg6[%c20, %c0_17], %50 {strides = array<i32>} : memref<36x256xf32, #tpu.memory_space<vmem>>, vector<4x255xf32>,
    %52 = vector.extract_strided_slice %1 {offsets = [0, 15], sizes = [4, 241], strides = [1, 1]} : vector<4x256xf32> to vector<4x241xf32>
    %53 = vector.extract_strided_slice %18 {offsets = [0, 0], sizes = [4, 241], strides = [1, 1]} : vector<4x256xi32> to vector<4x241xi32>
    %c1_i32_18 = arith.constant 1 : i32
    %54 = vector.broadcast %c1_i32_18 : i32 to vector<4x241xi32>
    %55 = arith.cmpi sge, %53, %54 : vector<4x241xi32>
    %cst_19 = arith.constant 0.000000e+00 : f32
    %56 = vector.broadcast %cst_19 : f32 to vector<4x241xf32>
    %57 = arith.select %55, %52, %56 : vector<4x241xi1>, vector<4x241xf32>
    %c24 = arith.constant 24 : index
    %c0_20 = arith.constant 0 : index
    %58 = vector.load %arg6[%c24, %c0_20] : memref<36x256xf32, #tpu.memory_space<vmem>>, vector<4x241xf32>
    tpu.vector_store %arg6[%c24, %c0_20], %57 {strides = array<i32>} : memref<36x256xf32, #tpu.memory_space<vmem>>, vector<4x241xf32>,
    %59 = vector.extract_strided_slice %1 {offsets = [0, 16], sizes = [4, 240], strides = [1, 1]} : vector<4x256xf32> to vector<4x240xf32>
    %c28 = arith.constant 28 : index
    %c0_21 = arith.constant 0 : index
    %60 = vector.load %arg6[%c28, %c0_21] : memref<36x256xf32, #tpu.memory_space<vmem>>, vector<4x240xf32>
    tpu.vector_store %arg6[%c28, %c0_21], %59 {strides = array<i32>} : memref<36x256xf32, #tpu.memory_space<vmem>>, vector<4x240xf32>,
    %61 = vector.extract_strided_slice %1 {offsets = [0, 17], sizes = [4, 239], strides = [1, 1]} : vector<4x256xf32> to vector<4x239xf32>
    %62 = vector.extract_strided_slice %18 {offsets = [0, 0], sizes = [4, 239], strides = [1, 1]} : vector<4x256xi32> to vector<4x239xi32>
    %c14_i32_22 = arith.constant 14 : i32
    %63 = vector.broadcast %c14_i32_22 : i32 to vector<4x239xi32>
    %64 = arith.cmpi sle, %62, %63 : vector<4x239xi32>
    %cst_23 = arith.constant 0.000000e+00 : f32
    %65 = vector.broadcast %cst_23 : f32 to vector<4x239xf32>
    %66 = arith.select %64, %61, %65 : vector<4x239xi1>, vector<4x239xf32>
    %c32 = arith.constant 32 : index
    %c0_24 = arith.constant 0 : index
    %67 = vector.load %arg6[%c32, %c0_24] : memref<36x256xf32, #tpu.memory_space<vmem>>, vector<4x239xf32>
    tpu.vector_store %arg6[%c32, %c0_24], %66 {strides = array<i32>} : memref<36x256xf32, #tpu.memory_space<vmem>>, vector<4x239xf32>,
    %c0_25 = arith.constant 0 : index
    %c0_26 = arith.constant 0 : index
    %68 = vector.load %arg2[%c0_25, %c0_26] : memref<4x36xf32, #tpu.memory_space<vmem>>, vector<4x36xf32>
    %c0_27 = arith.constant 0 : index
    %c0_28 = arith.constant 0 : index
    %69 = vector.load %arg6[%c0_27, %c0_28] : memref<36x256xf32, #tpu.memory_space<vmem>>, vector<36x256xf32>
    %cst_29 = arith.constant dense<0.000000e+00> : vector<4x256xf32>
    %70 = tpu.matmul %68, %69, %cst_29 {dimension_numbers = #tpu.dot_dimension_numbers<[1], [0], [0], [1], [0, 0, 1, 1], [], []>} : vector<4x36xf32>, vector<36x256xf32>, vector<4x256xf32> -> vector<4x256xf32>
    %c0_30 = arith.constant 0 : index
    %c0_31 = arith.constant 0 : index
    %c0_32 = arith.constant 0 : index
    %71 = vector.load %arg3[%c0_30, %c0_31, %c0_32] : memref<1x4x256xf32, #tpu.memory_space<vmem>>, vector<1x4x256xf32>
    %72 = vector.shape_cast %71 : vector<1x4x256xf32> to vector<4x256xf32>
    %73 = vector.shape_cast %70 : vector<4x256xf32> to vector<1x4x256xf32>
    tpu.vector_store %arg3[%c0_30, %c0_31, %c0_32], %73 {strides = array<i32>} : memref<1x4x256xf32, #tpu.memory_space<vmem>>, vector<1x4x256xf32>,
    %cst_33 = arith.constant dense<0.000000e+00> : vector<4xf32>
    %74 = vector.multi_reduction <add>, %70, %cst_33 [1] : vector<4x256xf32> to vector<4xf32>
    %75 = vector.shape_cast %74 : vector<4xf32> to vector<4x1xf32>
    %c0_34 = arith.constant 0 : index
    %c0_35 = arith.constant 0 : index
    %c0_36 = arith.constant 0 : index
    %76 = vector.load %arg4[%c0_34, %c0_35, %c0_36] : memref<1x4x1xf32, #tpu.memory_space<vmem>>, vector<1x4x1xf32>
    %77 = vector.shape_cast %76 : vector<1x4x1xf32> to vector<4x1xf32>
    %78 = vector.shape_cast %75 : vector<4x1xf32> to vector<1x4x1xf32>
    tpu.vector_store %arg4[%c0_34, %c0_35, %c0_36], %78 {strides = array<i32>} : memref<1x4x1xf32, #tpu.memory_space<vmem>>, vector<1x4x1xf32>,
    %79 = arith.mulf %70, %70 : vector<4x256xf32>
    %cst_37 = arith.constant dense<0.000000e+00> : vector<4xf32>
    %80 = vector.multi_reduction <add>, %79, %cst_37 [1] : vector<4x256xf32> to vector<4xf32>
    %81 = vector.shape_cast %80 : vector<4xf32> to vector<4x1xf32>
    %c0_38 = arith.constant 0 : index
    %c0_39 = arith.constant 0 : index
    %c0_40 = arith.constant 0 : index
    %82 = vector.load %arg5[%c0_38, %c0_39, %c0_40] : memref<1x4x1xf32, #tpu.memory_space<vmem>>, vector<1x4x1xf32>
    %83 = vector.shape_cast %82 : vector<1x4x1xf32> to vector<4x1xf32>
    %84 = vector.shape_cast %81 : vector<4x1xf32> to vector<1x4x1xf32>
    tpu.vector_store %arg5[%c0_38, %c0_39, %c0_40], %84 {strides = array<i32>} : memref<1x4x1xf32, #tpu.memory_space<vmem>>, vector<1x4x1xf32>,
    return
  }
  func.func @transform_0(%arg0: i32) -> (i32, i32, i32) {
    %c0_i32 = arith.constant 0 : i32
    %c0_i32_0 = arith.constant 0 : i32
    %c0_i32_1 = arith.constant 0 : i32
    return %arg0, %c0_i32, %c0_i32_0 : i32, i32, i32
  }
  func.func @transform_1(%arg0: i32) -> (i32, i32) {
    %c0_i32 = arith.constant 0 : i32
    %c0_i32_0 = arith.constant 0 : i32
    %c0_i32_1 = arith.constant 0 : i32
    return %c0_i32, %c0_i32_0 : i32, i32
  }
  func.func @transform_2(%arg0: i32) -> (i32, i32, i32) {
    %c0_i32 = arith.constant 0 : i32
    %c0_i32_0 = arith.constant 0 : i32
    %c0_i32_1 = arith.constant 0 : i32
    return %arg0, %c0_i32, %c0_i32_0 : i32, i32, i32
  }
  func.func @transform_3(%arg0: i32) -> (i32, i32, i32) {
    %c0_i32 = arith.constant 0 : i32
    %c0_i32_0 = arith.constant 0 : i32
    %c0_i32_1 = arith.constant 0 : i32
    return %arg0, %c0_i32, %c0_i32_0 : i32, i32, i32
  }
  func.func @transform_4(%arg0: i32) -> (i32, i32, i32) {
    %c0_i32 = arith.constant 0 : i32
    %c0_i32_0 = arith.constant 0 : i32
    %c0_i32_1 = arith.constant 0 : i32
    return %arg0, %c0_i32, %c0_i32_0 : i32, i32, i32
  }
}

module attributes {stable_mosaic.version = 11 : i64} {
  func.func @_bn_add_relu_kernel(%arg0: i32, %arg1: memref<1x4x256xf32, #tpu.memory_space<vmem>>, %arg2: memref<1x4x256xf32, #tpu.memory_space<vmem>>, %arg3: memref<4x1xf32, #tpu.memory_space<vmem>>, %arg4: memref<4x1xf32, #tpu.memory_space<vmem>>, %arg5: memref<1x4x256xf32, #tpu.memory_space<vmem>>) attributes {dimension_semantics = [#tpu.dimension_semantics<parallel>], iteration_bounds = array<i64: 2>, scalar_prefetch = 0 : i64, scratch_operands = 0 : i64, tpu.core_type = #tpu.core_type<tc>, window_params = [{transform_indices = @transform_0, window_bounds = array<i64: 1, 4, 256>}, {transform_indices = @transform_1, window_bounds = array<i64: 1, 4, 256>}, {pipeline_mode = #tpu.pipeline_mode<synchronous>, transform_indices = @transform_2, window_bounds = array<i64: 4, 1>}, {pipeline_mode = #tpu.pipeline_mode<synchronous>, transform_indices = @transform_3, window_bounds = array<i64: 4, 1>}, {transform_indices = @transform_4, window_bounds = array<i64: 1, 4, 256>}]} {
    %c0 = arith.constant 0 : index
    %c0_0 = arith.constant 0 : index
    %c0_1 = arith.constant 0 : index
    %0 = vector.load %arg1[%c0, %c0_0, %c0_1] : memref<1x4x256xf32, #tpu.memory_space<vmem>>, vector<1x4x256xf32>
    %1 = vector.shape_cast %0 : vector<1x4x256xf32> to vector<4x256xf32>
    %c0_2 = arith.constant 0 : index
    %c0_3 = arith.constant 0 : index
    %2 = vector.load %arg3[%c0_2, %c0_3] : memref<4x1xf32, #tpu.memory_space<vmem>>, vector<4x1xf32>
    %3 = vector.broadcast %2 : vector<4x1xf32> to vector<4x256xf32>
    %4 = arith.mulf %1, %3 : vector<4x256xf32>
    %c0_4 = arith.constant 0 : index
    %c0_5 = arith.constant 0 : index
    %5 = vector.load %arg4[%c0_4, %c0_5] : memref<4x1xf32, #tpu.memory_space<vmem>>, vector<4x1xf32>
    %6 = vector.broadcast %5 : vector<4x1xf32> to vector<4x256xf32>
    %7 = arith.addf %4, %6 : vector<4x256xf32>
    %c0_6 = arith.constant 0 : index
    %c0_7 = arith.constant 0 : index
    %c0_8 = arith.constant 0 : index
    %8 = vector.load %arg2[%c0_6, %c0_7, %c0_8] : memref<1x4x256xf32, #tpu.memory_space<vmem>>, vector<1x4x256xf32>
    %9 = vector.shape_cast %8 : vector<1x4x256xf32> to vector<4x256xf32>
    %10 = arith.addf %7, %9 : vector<4x256xf32>
    %cst = arith.constant 0.000000e+00 : f32
    %11 = vector.broadcast %cst : f32 to vector<4x256xf32>
    %12 = arith.maximumf %10, %11 : vector<4x256xf32>
    %c0_9 = arith.constant 0 : index
    %c0_10 = arith.constant 0 : index
    %c0_11 = arith.constant 0 : index
    %13 = vector.load %arg5[%c0_9, %c0_10, %c0_11] : memref<1x4x256xf32, #tpu.memory_space<vmem>>, vector<1x4x256xf32>
    %14 = vector.shape_cast %13 : vector<1x4x256xf32> to vector<4x256xf32>
    %15 = vector.shape_cast %12 : vector<4x256xf32> to vector<1x4x256xf32>
    tpu.vector_store %arg5[%c0_9, %c0_10, %c0_11], %15 {strides = array<i32>} : memref<1x4x256xf32, #tpu.memory_space<vmem>>, vector<1x4x256xf32>,
    return
  }
  func.func @transform_0(%arg0: i32) -> (i32, i32, i32) {
    %c0_i32 = arith.constant 0 : i32
    %c0_i32_0 = arith.constant 0 : i32
    %c0_i32_1 = arith.constant 0 : i32
    return %arg0, %c0_i32, %c0_i32_0 : i32, i32, i32
  }
  func.func @transform_1(%arg0: i32) -> (i32, i32, i32) {
    %c0_i32 = arith.constant 0 : i32
    %c0_i32_0 = arith.constant 0 : i32
    %c0_i32_1 = arith.constant 0 : i32
    return %arg0, %c0_i32, %c0_i32_0 : i32, i32, i32
  }
  func.func @transform_2(%arg0: i32) -> (i32, i32) {
    %c0_i32 = arith.constant 0 : i32
    %c0_i32_0 = arith.constant 0 : i32
    %c0_i32_1 = arith.constant 0 : i32
    return %c0_i32, %c0_i32_0 : i32, i32
  }
  func.func @transform_3(%arg0: i32) -> (i32, i32) {
    %c0_i32 = arith.constant 0 : i32
    %c0_i32_0 = arith.constant 0 : i32
    %c0_i32_1 = arith.constant 0 : i32
    return %c0_i32, %c0_i32_0 : i32, i32
  }
  func.func @transform_4(%arg0: i32) -> (i32, i32, i32) {
    %c0_i32 = arith.constant 0 : i32
    %c0_i32_0 = arith.constant 0 : i32
    %c0_i32_1 = arith.constant 0 : i32
    return %arg0, %c0_i32, %c0_i32_0 : i32, i32, i32
  }
}

module attributes {stable_mosaic.version = 11 : i64} {
  func.func @_bn_relu_conv2_kernel(%arg0: i32, %arg1: memref<1x4x256xf32, #tpu.memory_space<vmem>>, %arg2: memref<4x1xf32, #tpu.memory_space<vmem>>, %arg3: memref<4x1xf32, #tpu.memory_space<vmem>>, %arg4: memref<4x36xf32, #tpu.memory_space<vmem>>, %arg5: memref<1x4x256xf32, #tpu.memory_space<vmem>>, %arg6: memref<1x4x1xf32, #tpu.memory_space<vmem>>, %arg7: memref<1x4x1xf32, #tpu.memory_space<vmem>>, %arg8: memref<36x256xf32, #tpu.memory_space<vmem>>) attributes {dimension_semantics = [#tpu.dimension_semantics<parallel>], iteration_bounds = array<i64: 2>, scalar_prefetch = 0 : i64, scratch_operands = 1 : i64, tpu.core_type = #tpu.core_type<tc>, window_params = [{transform_indices = @transform_0, window_bounds = array<i64: 1, 4, 256>}, {pipeline_mode = #tpu.pipeline_mode<synchronous>, transform_indices = @transform_1, window_bounds = array<i64: 4, 1>}, {pipeline_mode = #tpu.pipeline_mode<synchronous>, transform_indices = @transform_2, window_bounds = array<i64: 4, 1>}, {pipeline_mode = #tpu.pipeline_mode<synchronous>, transform_indices = @transform_3, window_bounds = array<i64: 4, 36>}, {transform_indices = @transform_4, window_bounds = array<i64: 1, 4, 256>}, {transform_indices = @transform_5, window_bounds = array<i64: 1, 4, 1>}, {transform_indices = @transform_6, window_bounds = array<i64: 1, 4, 1>}]} {
    %c0 = arith.constant 0 : index
    %c0_0 = arith.constant 0 : index
    %c0_1 = arith.constant 0 : index
    %0 = vector.load %arg1[%c0, %c0_0, %c0_1] : memref<1x4x256xf32, #tpu.memory_space<vmem>>, vector<1x4x256xf32>
    %1 = vector.shape_cast %0 : vector<1x4x256xf32> to vector<4x256xf32>
    %c0_2 = arith.constant 0 : index
    %c0_3 = arith.constant 0 : index
    %2 = vector.load %arg2[%c0_2, %c0_3] : memref<4x1xf32, #tpu.memory_space<vmem>>, vector<4x1xf32>
    %3 = vector.broadcast %2 : vector<4x1xf32> to vector<4x256xf32>
    %4 = arith.mulf %1, %3 : vector<4x256xf32>
    %c0_4 = arith.constant 0 : index
    %c0_5 = arith.constant 0 : index
    %5 = vector.load %arg3[%c0_4, %c0_5] : memref<4x1xf32, #tpu.memory_space<vmem>>, vector<4x1xf32>
    %6 = vector.broadcast %5 : vector<4x1xf32> to vector<4x256xf32>
    %7 = arith.addf %4, %6 : vector<4x256xf32>
    %cst = arith.constant 0.000000e+00 : f32
    %8 = vector.broadcast %cst : f32 to vector<4x256xf32>
    %9 = arith.maximumf %7, %8 : vector<4x256xf32>
    %10 = tpu.iota {dimensions = array<i32: 1>} : vector<4x256xi32>
    %c16_i32 = arith.constant 16 : i32
    %c0_i32 = arith.constant 0 : i32
    %11 = arith.cmpi eq, %c16_i32, %c0_i32 : i32
    %c1_i32 = arith.constant 1 : i32
    %12 = arith.select %11, %c1_i32, %c16_i32 : i32
    %13 = vector.broadcast %12 : i32 to vector<4x256xi32>
    %14 = arith.remsi %10, %13 : vector<4x256xi32>
    %c0_i32_6 = arith.constant 0 : i32
    %15 = vector.broadcast %c0_i32_6 : i32 to vector<4x256xi32>
    %16 = arith.cmpi ne, %14, %15 : vector<4x256xi32>
    %c0_i32_7 = arith.constant 0 : i32
    %17 = vector.broadcast %c0_i32_7 : i32 to vector<4x256xi32>
    %18 = arith.cmpi slt, %14, %17 : vector<4x256xi32>
    %c0_i32_8 = arith.constant 0 : i32
    %19 = arith.cmpi slt, %12, %c0_i32_8 : i32
    %20 = vector.broadcast %19 : i1 to vector<4x256xi1>
    %21 = vector.broadcast %20 : vector<4x256xi1> to vector<4x256xi1>
    %22 = arith.xori %18, %21 : vector<4x256xi1>
    %23 = arith.andi %22, %16 : vector<4x256xi1>
    %24 = vector.broadcast %12 : i32 to vector<4x256xi32>
    %25 = arith.addi %14, %24 : vector<4x256xi32>
    %26 = arith.select %23, %25, %14 : vector<4x256xi1>, vector<4x256xi32>
    %cst_9 = arith.constant 0.000000e+00 : f32
    %27 = vector.broadcast %cst_9 : f32 to vector<36x256xf32>
    %c0_10 = arith.constant 0 : index
    %c0_11 = arith.constant 0 : index
    %28 = vector.load %arg8[%c0_10, %c0_11] : memref<36x256xf32, #tpu.memory_space<vmem>>, vector<36x256xf32>
    tpu.vector_store %arg8[%c0_10, %c0_11], %27 {strides = array<i32>} : memref<36x256xf32, #tpu.memory_space<vmem>>, vector<36x256xf32>,
    %29 = vector.extract_strided_slice %9 {offsets = [0, 0], sizes = [4, 239], strides = [1, 1]} : vector<4x256xf32> to vector<4x239xf32>
    %30 = vector.extract_strided_slice %26 {offsets = [0, 17], sizes = [4, 239], strides = [1, 1]} : vector<4x256xi32> to vector<4x239xi32>
    %c1_i32_12 = arith.constant 1 : i32
    %31 = vector.broadcast %c1_i32_12 : i32 to vector<4x239xi32>
    %32 = arith.cmpi sge, %30, %31 : vector<4x239xi32>
    %cst_13 = arith.constant 0.000000e+00 : f32
    %33 = vector.broadcast %cst_13 : f32 to vector<4x239xf32>
    %34 = arith.select %32, %29, %33 : vector<4x239xi1>, vector<4x239xf32>
    %c0_14 = arith.constant 0 : index
    %c17 = arith.constant 17 : index
    %35 = vector.load %arg8[%c0_14, %c17] : memref<36x256xf32, #tpu.memory_space<vmem>>, vector<4x239xf32>
    tpu.vector_store %arg8[%c0_14, %c17], %34 {strides = array<i32>} : memref<36x256xf32, #tpu.memory_space<vmem>>, vector<4x239xf32>,
    %36 = vector.extract_strided_slice %9 {offsets = [0, 0], sizes = [4, 240], strides = [1, 1]} : vector<4x256xf32> to vector<4x240xf32>
    %c4 = arith.constant 4 : index
    %c16 = arith.constant 16 : index
    %37 = vector.load %arg8[%c4, %c16] : memref<36x256xf32, #tpu.memory_space<vmem>>, vector<4x240xf32>
    tpu.vector_store %arg8[%c4, %c16], %36 {strides = array<i32>} : memref<36x256xf32, #tpu.memory_space<vmem>>, vector<4x240xf32>,
    %38 = vector.extract_strided_slice %9 {offsets = [0, 0], sizes = [4, 241], strides = [1, 1]} : vector<4x256xf32> to vector<4x241xf32>
    %39 = vector.extract_strided_slice %26 {offsets = [0, 15], sizes = [4, 241], strides = [1, 1]} : vector<4x256xi32> to vector<4x241xi32>
    %c14_i32 = arith.constant 14 : i32
    %40 = vector.broadcast %c14_i32 : i32 to vector<4x241xi32>
    %41 = arith.cmpi sle, %39, %40 : vector<4x241xi32>
    %cst_15 = arith.constant 0.000000e+00 : f32
    %42 = vector.broadcast %cst_15 : f32 to vector<4x241xf32>
    %43 = arith.select %41, %38, %42 : vector<4x241xi1>, vector<4x241xf32>
    %c8 = arith.constant 8 : index
    %c15 = arith.constant 15 : index
    %44 = vector.load %arg8[%c8, %c15] : memref<36x256xf32, #tpu.memory_space<vmem>>, vector<4x241xf32>
    tpu.vector_store %arg8[%c8, %c15], %43 {strides = array<i32>} : memref<36x256xf32, #tpu.memory_space<vmem>>, vector<4x241xf32>,
    %45 = vector.extract_strided_slice %9 {offsets = [0, 0], sizes = [4, 255], strides = [1, 1]} : vector<4x256xf32> to vector<4x255xf32>
    %46 = vector.extract_strided_slice %26 {offsets = [0, 1], sizes = [4, 255], strides = [1, 1]} : vector<4x256xi32> to vector<4x255xi32>
    %c1_i32_16 = arith.constant 1 : i32
    %47 = vector.broadcast %c1_i32_16 : i32 to vector<4x255xi32>
    %48 = arith.cmpi sge, %46, %47 : vector<4x255xi32>
    %cst_17 = arith.constant 0.000000e+00 : f32
    %49 = vector.broadcast %cst_17 : f32 to vector<4x255xf32>
    %50 = arith.select %48, %45, %49 : vector<4x255xi1>, vector<4x255xf32>
    %c12 = arith.constant 12 : index
    %c1 = arith.constant 1 : index
    %51 = vector.load %arg8[%c12, %c1] : memref<36x256xf32, #tpu.memory_space<vmem>>, vector<4x255xf32>
    tpu.vector_store %arg8[%c12, %c1], %50 {strides = array<i32>} : memref<36x256xf32, #tpu.memory_space<vmem>>, vector<4x255xf32>,
    %c16_18 = arith.constant 16 : index
    %c0_19 = arith.constant 0 : index
    %52 = vector.load %arg8[%c16_18, %c0_19] : memref<36x256xf32, #tpu.memory_space<vmem>>, vector<4x256xf32>
    tpu.vector_store %arg8[%c16_18, %c0_19], %9 {strides = array<i32>} : memref<36x256xf32, #tpu.memory_space<vmem>>, vector<4x256xf32>,
    %53 = vector.extract_strided_slice %9 {offsets = [0, 1], sizes = [4, 255], strides = [1, 1]} : vector<4x256xf32> to vector<4x255xf32>
    %54 = vector.extract_strided_slice %26 {offsets = [0, 0], sizes = [4, 255], strides = [1, 1]} : vector<4x256xi32> to vector<4x255xi32>
    %c14_i32_20 = arith.constant 14 : i32
    %55 = vector.broadcast %c14_i32_20 : i32 to vector<4x255xi32>
    %56 = arith.cmpi sle, %54, %55 : vector<4x255xi32>
    %cst_21 = arith.constant 0.000000e+00 : f32
    %57 = vector.broadcast %cst_21 : f32 to vector<4x255xf32>
    %58 = arith.select %56, %53, %57 : vector<4x255xi1>, vector<4x255xf32>
    %c20 = arith.constant 20 : index
    %c0_22 = arith.constant 0 : index
    %59 = vector.load %arg8[%c20, %c0_22] : memref<36x256xf32, #tpu.memory_space<vmem>>, vector<4x255xf32>
    tpu.vector_store %arg8[%c20, %c0_22], %58 {strides = array<i32>} : memref<36x256xf32, #tpu.memory_space<vmem>>, vector<4x255xf32>,
    %60 = vector.extract_strided_slice %9 {offsets = [0, 15], sizes = [4, 241], strides = [1, 1]} : vector<4x256xf32> to vector<4x241xf32>
    %61 = vector.extract_strided_slice %26 {offsets = [0, 0], sizes = [4, 241], strides = [1, 1]} : vector<4x256xi32> to vector<4x241xi32>
    %c1_i32_23 = arith.constant 1 : i32
    %62 = vector.broadcast %c1_i32_23 : i32 to vector<4x241xi32>
    %63 = arith.cmpi sge, %61, %62 : vector<4x241xi32>
    %cst_24 = arith.constant 0.000000e+00 : f32
    %64 = vector.broadcast %cst_24 : f32 to vector<4x241xf32>
    %65 = arith.select %63, %60, %64 : vector<4x241xi1>, vector<4x241xf32>
    %c24 = arith.constant 24 : index
    %c0_25 = arith.constant 0 : index
    %66 = vector.load %arg8[%c24, %c0_25] : memref<36x256xf32, #tpu.memory_space<vmem>>, vector<4x241xf32>
    tpu.vector_store %arg8[%c24, %c0_25], %65 {strides = array<i32>} : memref<36x256xf32, #tpu.memory_space<vmem>>, vector<4x241xf32>,
    %67 = vector.extract_strided_slice %9 {offsets = [0, 16], sizes = [4, 240], strides = [1, 1]} : vector<4x256xf32> to vector<4x240xf32>
    %c28 = arith.constant 28 : index
    %c0_26 = arith.constant 0 : index
    %68 = vector.load %arg8[%c28, %c0_26] : memref<36x256xf32, #tpu.memory_space<vmem>>, vector<4x240xf32>
    tpu.vector_store %arg8[%c28, %c0_26], %67 {strides = array<i32>} : memref<36x256xf32, #tpu.memory_space<vmem>>, vector<4x240xf32>,
    %69 = vector.extract_strided_slice %9 {offsets = [0, 17], sizes = [4, 239], strides = [1, 1]} : vector<4x256xf32> to vector<4x239xf32>
    %70 = vector.extract_strided_slice %26 {offsets = [0, 0], sizes = [4, 239], strides = [1, 1]} : vector<4x256xi32> to vector<4x239xi32>
    %c14_i32_27 = arith.constant 14 : i32
    %71 = vector.broadcast %c14_i32_27 : i32 to vector<4x239xi32>
    %72 = arith.cmpi sle, %70, %71 : vector<4x239xi32>
    %cst_28 = arith.constant 0.000000e+00 : f32
    %73 = vector.broadcast %cst_28 : f32 to vector<4x239xf32>
    %74 = arith.select %72, %69, %73 : vector<4x239xi1>, vector<4x239xf32>
    %c32 = arith.constant 32 : index
    %c0_29 = arith.constant 0 : index
    %75 = vector.load %arg8[%c32, %c0_29] : memref<36x256xf32, #tpu.memory_space<vmem>>, vector<4x239xf32>
    tpu.vector_store %arg8[%c32, %c0_29], %74 {strides = array<i32>} : memref<36x256xf32, #tpu.memory_space<vmem>>, vector<4x239xf32>,
    %c0_30 = arith.constant 0 : index
    %c0_31 = arith.constant 0 : index
    %76 = vector.load %arg4[%c0_30, %c0_31] : memref<4x36xf32, #tpu.memory_space<vmem>>, vector<4x36xf32>
    %c0_32 = arith.constant 0 : index
    %c0_33 = arith.constant 0 : index
    %77 = vector.load %arg8[%c0_32, %c0_33] : memref<36x256xf32, #tpu.memory_space<vmem>>, vector<36x256xf32>
    %cst_34 = arith.constant dense<0.000000e+00> : vector<4x256xf32>
    %78 = tpu.matmul %76, %77, %cst_34 {dimension_numbers = #tpu.dot_dimension_numbers<[1], [0], [0], [1], [0, 0, 1, 1], [], []>} : vector<4x36xf32>, vector<36x256xf32>, vector<4x256xf32> -> vector<4x256xf32>
    %c0_35 = arith.constant 0 : index
    %c0_36 = arith.constant 0 : index
    %c0_37 = arith.constant 0 : index
    %79 = vector.load %arg5[%c0_35, %c0_36, %c0_37] : memref<1x4x256xf32, #tpu.memory_space<vmem>>, vector<1x4x256xf32>
    %80 = vector.shape_cast %79 : vector<1x4x256xf32> to vector<4x256xf32>
    %81 = vector.shape_cast %78 : vector<4x256xf32> to vector<1x4x256xf32>
    tpu.vector_store %arg5[%c0_35, %c0_36, %c0_37], %81 {strides = array<i32>} : memref<1x4x256xf32, #tpu.memory_space<vmem>>, vector<1x4x256xf32>,
    %cst_38 = arith.constant dense<0.000000e+00> : vector<4xf32>
    %82 = vector.multi_reduction <add>, %78, %cst_38 [1] : vector<4x256xf32> to vector<4xf32>
    %83 = vector.shape_cast %82 : vector<4xf32> to vector<4x1xf32>
    %c0_39 = arith.constant 0 : index
    %c0_40 = arith.constant 0 : index
    %c0_41 = arith.constant 0 : index
    %84 = vector.load %arg6[%c0_39, %c0_40, %c0_41] : memref<1x4x1xf32, #tpu.memory_space<vmem>>, vector<1x4x1xf32>
    %85 = vector.shape_cast %84 : vector<1x4x1xf32> to vector<4x1xf32>
    %86 = vector.shape_cast %83 : vector<4x1xf32> to vector<1x4x1xf32>
    tpu.vector_store %arg6[%c0_39, %c0_40, %c0_41], %86 {strides = array<i32>} : memref<1x4x1xf32, #tpu.memory_space<vmem>>, vector<1x4x1xf32>,
    %87 = arith.mulf %78, %78 : vector<4x256xf32>
    %cst_42 = arith.constant dense<0.000000e+00> : vector<4xf32>
    %88 = vector.multi_reduction <add>, %87, %cst_42 [1] : vector<4x256xf32> to vector<4xf32>
    %89 = vector.shape_cast %88 : vector<4xf32> to vector<4x1xf32>
    %c0_43 = arith.constant 0 : index
    %c0_44 = arith.constant 0 : index
    %c0_45 = arith.constant 0 : index
    %90 = vector.load %arg7[%c0_43, %c0_44, %c0_45] : memref<1x4x1xf32, #tpu.memory_space<vmem>>, vector<1x4x1xf32>
    %91 = vector.shape_cast %90 : vector<1x4x1xf32> to vector<4x1xf32>
    %92 = vector.shape_cast %89 : vector<4x1xf32> to vector<1x4x1xf32>
    tpu.vector_store %arg7[%c0_43, %c0_44, %c0_45], %92 {strides = array<i32>} : memref<1x4x1xf32, #tpu.memory_space<vmem>>, vector<1x4x1xf32>,
    return
  }
  func.func @transform_0(%arg0: i32) -> (i32, i32, i32) {
    %c0_i32 = arith.constant 0 : i32
    %c0_i32_0 = arith.constant 0 : i32
    %c0_i32_1 = arith.constant 0 : i32
    return %arg0, %c0_i32, %c0_i32_0 : i32, i32, i32
  }
  func.func @transform_1(%arg0: i32) -> (i32, i32) {
    %c0_i32 = arith.constant 0 : i32
    %c0_i32_0 = arith.constant 0 : i32
    %c0_i32_1 = arith.constant 0 : i32
    return %c0_i32, %c0_i32_0 : i32, i32
  }
  func.func @transform_2(%arg0: i32) -> (i32, i32) {
    %c0_i32 = arith.constant 0 : i32
    %c0_i32_0 = arith.constant 0 : i32
    %c0_i32_1 = arith.constant 0 : i32
    return %c0_i32, %c0_i32_0 : i32, i32
  }
  func.func @transform_3(%arg0: i32) -> (i32, i32) {
    %c0_i32 = arith.constant 0 : i32
    %c0_i32_0 = arith.constant 0 : i32
    %c0_i32_1 = arith.constant 0 : i32
    return %c0_i32, %c0_i32_0 : i32, i32
  }
  func.func @transform_4(%arg0: i32) -> (i32, i32, i32) {
    %c0_i32 = arith.constant 0 : i32
    %c0_i32_0 = arith.constant 0 : i32
    %c0_i32_1 = arith.constant 0 : i32
    return %arg0, %c0_i32, %c0_i32_0 : i32, i32, i32
  }
  func.func @transform_5(%arg0: i32) -> (i32, i32, i32) {
    %c0_i32 = arith.constant 0 : i32
    %c0_i32_0 = arith.constant 0 : i32
    %c0_i32_1 = arith.constant 0 : i32
    return %arg0, %c0_i32, %c0_i32_0 : i32, i32, i32
  }
  func.func @transform_6(%arg0: i32) -> (i32, i32, i32) {
    %c0_i32 = arith.constant 0 : i32
    %c0_i32_0 = arith.constant 0 : i32
    %c0_i32_1 = arith.constant 0 : i32
    return %arg0, %c0_i32, %c0_i32_0 : i32, i32, i32
  }
}

</mosaic_0001>

<llo_original>
// kernel: residual_block.5
$region0: #{residual_block.5}
  #allocation0 [shape = 'u32[]', space=smem, size = 0x4, offset = 0x4, fixed_abs, tag = 'smem constant byte address 0x4 - core index']
  #allocation1 [shape = 'u32[144,128]{1,0:T(1,128)}', space=vmem, size = 0x12000, scoped, tag = 'internal scratch']
  %s0 = inlined_call_operand.vmem [shape: f32[2,4,256], index: 0, kind: input, shape index: {}]
  %s1 = inlined_call_operand.vmem [shape: f32[2,4,256], index: 1, kind: input, shape index: {}]
  %s2 = inlined_call_operand.vmem [shape: f32[4,1], index: 2, kind: input, shape index: {}]
  %s3 = inlined_call_operand.vmem [shape: f32[4,1], index: 3, kind: input, shape index: {}]
  %s4 = inlined_call_operand.vmem [shape: f32[2,4,256], index: 4, kind: output, shape index: {}]
  %s5 = sld [smem:[#allocation0]]
  $region49: #{residual_block.5} parent=0
    _
  %s7 = ssub.s32 1, %s5
  %s8 = scalar_select 0, %s7, %s5
  loop: start=0, step=1, limit=4
  $region2: #{residual_block.5} parent=0 // loop_pre_header
    _
  $region3: #{residual_block.5} parent=0 // loop_header
    %s10 = sphi 0, %s14
    %p11 = scmp.ge.s32.totalorder %s10, 4
    %s20 = sphi 0, %s22
    %s23 = sphi 0, %s20
    %s24 = sphi 0, %s23
    %s40 = sphi 0, %s24
    %s46 = sphi 0, %s48
    %s49 = sphi 0, %s46
    %s50 = sphi 0, %s49
    %s66 = sphi 0, %s50
    %s70 = sphi 0, %s70
    %s72 = sphi 0, %s70
    %s73 = sphi 0, %s72
    %s87 = sphi 0, %s73
    %s91 = sphi 0, %s91
    %s93 = sphi 0, %s91
    %s94 = sphi 0, %s93
    %s108 = sphi 0, %s94
    %s114 = sphi 0, %s116
    %s117 = sphi 0, %s114
    %s118 = sphi 0, %s117
    %s134 = sphi 0, %s118
  $region4: #{residual_block.5} parent=0 // loop_header_branch
    %13 = sbr.rel (%p11) target = $region8
  $region5: #{residual_block.5} parent=0 // loop_body
    %s15 = ssub.s32 %s10, 1
    %s16 = ssub.s32 %s10, 2
    %s17 = sadd.s32 %s10, 1
    %s18 = ssub.s32 %s10, %s17
    %p19 = scmp.eq.s32.totalorder %s18, 0
    %s21 = sadd.s32 %s20, 1
    %s22 = scalar_select %p19, %s20, %s21
    %p25 = pneg %p19
    %p26 = scmp.eq.s32.totalorder %s10, 1
    %p27 = por %p25, %p26
    %p28 = scmp.ne.s32.totalorder %s20, %s23
    %p29 = scmp.eq.s32.totalorder %s10, 0
    %p30 = por %p28, %p29
    %p31 = scmp.ne.s32.totalorder %s20, %s23
    %p32 = scmp.eq.s32.totalorder %s15, 1
    %p33 = por %p31, %p32
    %p34 = scmp.ne.s32.totalorder %s23, %s24
    %p35 = scmp.eq.s32.totalorder %s15, 0
    %p36 = por %p34, %p35
    %p37 = scmp.ne.s32.totalorder %s23, %s24
    %p38 = scmp.eq.s32.totalorder %s16, 1
    %p39 = por %p37, %p38
    %p41 = scmp.ne.s32.totalorder %s24, %s40
    %p42 = scmp.eq.s32.totalorder %s16, 0
    %p43 = por %p41, %p42
    %s44 = ssub.s32 %s10, %s17
    %p45 = scmp.eq.s32.totalorder %s44, 0
    %s47 = sadd.s32 %s46, 1
    %s48 = scalar_select %p45, %s46, %s47
    %p51 = pneg %p45
    %p52 = scmp.eq.s32.totalorder %s10, 1
    %p53 = por %p51, %p52
    %p54 = scmp.ne.s32.totalorder %s46, %s49
    %p55 = scmp.eq.s32.totalorder %s10, 0
    %p56 = por %p54, %p55
    %p57 = scmp.ne.s32.totalorder %s46, %s49
    %p58 = scmp.eq.s32.totalorder %s15, 1
    %p59 = por %p57, %p58
    %p60 = scmp.ne.s32.totalorder %s49, %s50
    %p61 = scmp.eq.s32.totalorder %s15, 0
    %p62 = por %p60, %p61
    %p63 = scmp.ne.s32.totalorder %s49, %s50
    %p64 = scmp.eq.s32.totalorder %s16, 1
    %p65 = por %p63, %p64
    %p67 = scmp.ne.s32.totalorder %s50, %s66
    %p68 = scmp.eq.s32.totalorder %s16, 0
    %p69 = por %p67, %p68
    %s71 = sadd.s32 %s70, 1
    %p74 = scmp.eq.s32.totalorder %s10, 1
    %p75 = scmp.ne.s32.totalorder %s70, %s72
    %p76 = scmp.eq.s32.totalorder %s10, 0
    %p77 = por %p75, %p76
    %p78 = scmp.ne.s32.totalorder %s70, %s72
    %p79 = scmp.eq.s32.totalorder %s15, 1
    %p80 = por %p78, %p79
    %p81 = scmp.ne.s32.totalorder %s72, %s73
    %p82 = scmp.eq.s32.totalorder %s15, 0
    %p83 = por %p81, %p82
    %p84 = scmp.ne.s32.totalorder %s72, %s73
    %p85 = scmp.eq.s32.totalorder %s16, 1
    %p86 = por %p84, %p85
    %p88 = scmp.ne.s32.totalorder %s73, %s87
    %p89 = scmp.eq.s32.totalorder %s16, 0
    %p90 = por %p88, %p89
    %s92 = sadd.s32 %s91, 1
    %p95 = scmp.eq.s32.totalorder %s10, 1
    %p96 = scmp.ne.s32.totalorder %s91, %s93
    %p97 = scmp.eq.s32.totalorder %s10, 0
    %p98 = por %p96, %p97
    %p99 = scmp.ne.s32.totalorder %s91, %s93
    %p100 = scmp.eq.s32.totalorder %s15, 1
    %p101 = por %p99, %p100
    %p102 = scmp.ne.s32.totalorder %s93, %s94
    %p103 = scmp.eq.s32.totalorder %s15, 0
    %p104 = por %p102, %p103
    %p105 = scmp.ne.s32.totalorder %s93, %s94
    %p106 = scmp.eq.s32.totalorder %s16, 1
    %p107 = por %p105, %p106
    %p109 = scmp.ne.s32.totalorder %s94, %s108
    %p110 = scmp.eq.s32.totalorder %s16, 0
    %p111 = por %p109, %p110
    %s112 = ssub.s32 %s10, %s17
    %p113 = scmp.eq.s32.totalorder %s112, 0
    %s115 = sadd.s32 %s114, 1
    %s116 = scalar_select %p113, %s114, %s115
    %p119 = pneg %p113
    %p120 = scmp.eq.s32.totalorder %s10, 1
    %p121 = por %p119, %p120
    %p122 = scmp.ne.s32.totalorder %s114, %s117
    %p123 = scmp.eq.s32.totalorder %s10, 0
    %p124 = por %p122, %p123
    %p125 = scmp.ne.s32.totalorder %s114, %s117
    %p126 = scmp.eq.s32.totalorder %s15, 1
    %p127 = por %p125, %p126
    %p128 = scmp.ne.s32.totalorder %s117, %s118
    %p129 = scmp.eq.s32.totalorder %s15, 0
    %p130 = por %p128, %p129
    %p131 = scmp.ne.s32.totalorder %s117, %s118
    %p132 = scmp.eq.s32.totalorder %s16, 1
    %p133 = por %p131, %p132
    %p135 = scmp.ne.s32.totalorder %s118, %s134
    %p136 = scmp.eq.s32.totalorder %s16, 0
    %p137 = por %p135, %p136
    %p138 = scmp.le.s32.totalorder 1, %s10
    %p139 = scmp.lt.s32.totalorder %s10, 3
    %p140 = pnand %p138, %p139
    %p141 = pneg %p140
    // Predicated region
    $region9: #{residual_block.5} parent=5 // pred_check
      _
    $region10: #{residual_block.5} parent=5 // pred_check_branch
      %143 = sbr.rel (%p140) target = $region12
    $region11: #{residual_block.5} parent=5 // pred_region
      %s144 = ssub.s32 %s10, 1
      // Predicated region
      $region13: #{residual_block.5} parent=11 // pred_check
        %p145 = pneg %p83
      $region14: #{residual_block.5} parent=11 // pred_check_branch
        %147 = sbr.rel (%p145) target = $region16
      $region15: #{residual_block.5} parent=11 // pred_region
        _
      $region16: #{residual_block.5} parent=11 // pred_fallthru
        _
      // Predicated region
      $region17: #{residual_block.5} parent=11 // pred_check
        %p148 = pneg %p104
      $region18: #{residual_block.5} parent=11 // pred_check_branch
        %150 = sbr.rel (%p148) target = $region20
      $region19: #{residual_block.5} parent=11 // pred_region
        _
      $region20: #{residual_block.5} parent=11 // pred_fallthru
        _
    $region12: #{residual_block.5} parent=5 // pred_fallthru
      _
    %p151 = scmp.lt.s32.totalorder %s10, 2
    // Predicated region
    $region21: #{residual_block.5} parent=5 // pred_check
      %p152 = pneg %p151
    $region22: #{residual_block.5} parent=5 // pred_check_branch
      %154 = sbr.rel (%p152) target = $region24
    $region23: #{residual_block.5} parent=5 // pred_region
      // Predicated region
      $region25: #{residual_block.5} parent=23 // pred_check
        %p155 = pneg %p30
      $region26: #{residual_block.5} parent=23 // pred_check_branch
        %157 = sbr.rel (%p155) target = $region28
      $region27: #{residual_block.5} parent=23 // pred_region
        %p158 = scmp.lt.s32.totalorder %s10, 1
        %s159 = scalar_select %p158, %s10, 1
        %s160 = smul.addr %s159, 2
        %s161 = smul.addr %s160, 4
        %s162 = scalar_lea.vmem %s0, %s161
      $region28: #{residual_block.5} parent=23 // pred_fallthru
        _
      // Predicated region
      $region29: #{residual_block.5} parent=23 // pred_check
        %p163 = pneg %p56
      $region30: #{residual_block.5} parent=23 // pred_check_branch
        %165 = sbr.rel (%p163) target = $region32
      $region31: #{residual_block.5} parent=23 // pred_region
        %p166 = scmp.lt.s32.totalorder %s10, 1
        %s167 = scalar_select %p166, %s10, 1
        %s168 = smul.addr %s167, 2
        %s169 = smul.addr %s168, 4
        %s170 = scalar_lea.vmem %s1, %s169
      $region32: #{residual_block.5} parent=23 // pred_fallthru
        _
    $region24: #{residual_block.5} parent=5 // pred_fallthru
      _
    %p171 = scmp.le.s32.totalorder 1, %s10
    %p172 = scmp.lt.s32.totalorder %s10, 3
    %p173 = pnand %p171, %p172
    %p174 = pneg %p173
    // Predicated region
    $region33: #{residual_block.5} parent=5 // pred_check
      _
    $region34: #{residual_block.5} parent=5 // pred_check_branch
      %176 = sbr.rel (%p173) target = $region36
    $region35: #{residual_block.5} parent=5 // pred_region
      %s177 = ssub.s32 %s10, 1
      %p178 = scmp.lt.s32.totalorder %s15, 1
      %s179 = scalar_select %p178, %s15, 1
      %s180 = smul.addr %s179, 2
      %s181 = smul.addr %s180, 4
      %s182 = scalar_lea.vmem %s0, %s181
      %p183 = pneg %p36
      %p184 = pneg %p33
      %p185 = scmp.lt.s32.totalorder %s15, 1
      %s186 = scalar_select %p185, %s15, 1
      %s187 = smul.addr %s186, 2
      %s188 = smul.addr %s187, 4
      %s189 = scalar_lea.vmem %s1, %s188
      %p190 = pneg %p62
      %p191 = pneg %p59
      %p192 = pneg %p83
      %p193 = pneg %p80
      %p194 = pneg %p104
      %p195 = pneg %p101
      %p196 = pneg %p130
      %p197 = pneg %p127
      %p198 = scmp.lt.s32.totalorder %s15, 1
      %s199 = scalar_select %p198, %s15, 1
      %s200 = smul.addr %s199, 2
      %s201 = smul.addr %s200, 4
      %s202 = scalar_lea.vmem %s4, %s201
      %p203 = scmp.lt.s32.totalorder %s15, 1
      %s204 = scalar_select %p203, %s15, 1
      %s205 = smul.addr %s204, 2
      %s206 = smul.addr %s205, 4
      %s207 = scalar_lea.vmem %s0, %s206
      %p208 = scmp.lt.s32.totalorder %s15, 1
      %s209 = scalar_select %p208, %s15, 1
      %s210 = smul.addr %s209, 2
      %s211 = smul.addr %s210, 4
      %s212 = scalar_lea.vmem %s1, %s211
      %p213 = scmp.lt.s32.totalorder %s15, 1
      %s214 = scalar_select %p213, %s15, 1
      %s215 = smul.addr %s214, 2
      %s216 = smul.addr %s215, 4
      %s217 = scalar_lea.vmem %s4, %s216
      %v218 = vld [vmem:[%s207] sm:$0xff]
      %v219 = vld [vmem:[%s2] sm:$0xf]
      %221 = vset.pattern.permute.xlu0 0
      %222 = vperm.xlu0 %221, %v219
      %v223 = vpop.permute.xlu0 %222
      %v225 = vunpack.c.l.s4 839922192
      %v226 = vunpack.c.0.s8 %v225
      %v227 = vlaneseq
      %v228 = vshrl.u32 %v227, 7
      %v229 = vsub.s32 %v226, %v228
      %v230 = vrot.slane %v223, %v229
      %v232 = vmul.f32 %v218, %v230
      %v233 = vld [vmem:[%s3] sm:$0xf]
      %235 = vset.pattern.permute.xlu0 0
      %236 = vperm.xlu0 %235, %v233
      %v237 = vpop.permute.xlu0 %236
      %v239 = vunpack.c.l.s4 839922192
      %v240 = vunpack.c.0.s8 %v239
      %v241 = vlaneseq
      %v242 = vshrl.u32 %v241, 7
      %v243 = vsub.s32 %v240, %v242
      %v244 = vrot.slane %v237, %v243
      %v246 = vadd.f32 %v232, %v244
      %v247 = vld [vmem:[%s212] sm:$0xff]
      %v248 = vadd.f32 %v246, %v247
      %v249 = vmax.f32 %v248, 0.0
      %250 = vst [vmem:[%s217] sm:$0xff] %v249
      %p251 = scmp.lt.s32.totalorder %s15, 1
      %s252 = scalar_select %p251, %s15, 1
      %s253 = smul.addr %s252, 2
      %s254 = smul.addr %s253, 4
      %s255 = scalar_lea.vmem %s4, %s254
      // Predicated region
      $region37: #{residual_block.5} parent=35 // pred_check
        %p256 = pneg %p127
      $region38: #{residual_block.5} parent=35 // pred_check_branch
        %258 = sbr.rel (%p256) target = $region40
      $region39: #{residual_block.5} parent=35 // pred_region
        _
      $region40: #{residual_block.5} parent=35 // pred_fallthru
        _
    $region36: #{residual_block.5} parent=5 // pred_fallthru
      _
    %p259 = scmp.le.s32.totalorder 2, %s10
    // Predicated region
    $region41: #{residual_block.5} parent=5 // pred_check
      %p260 = pneg %p259
    $region42: #{residual_block.5} parent=5 // pred_check_branch
      %262 = sbr.rel (%p260) target = $region44
    $region43: #{residual_block.5} parent=5 // pred_region
      %s263 = ssub.s32 %s10, 2
      // Predicated region
      $region45: #{residual_block.5} parent=43 // pred_check
        %p264 = pneg %p133
      $region46: #{residual_block.5} parent=43 // pred_check_branch
        %266 = sbr.rel (%p264) target = $region48
      $region47: #{residual_block.5} parent=43 // pred_region
        %p267 = scmp.lt.s32.totalorder %s16, 1
        %s268 = scalar_select %p267, %s16, 1
        %s269 = smul.addr %s268, 2
        %s270 = smul.addr %s269, 4
        %s271 = scalar_lea.vmem %s4, %s270
      $region48: #{residual_block.5} parent=43 // pred_fallthru
        _
    $region44: #{residual_block.5} parent=5 // pred_fallthru
      _
  $region6: #{residual_block.5} parent=0 // loop_footer
    %s14 = sadd.s32 1, %s10
  $region7: #{residual_block.5} parent=0 // loop_footer_branch
    %9 = sbr.rel target = $region3
  $region8: #{residual_block.5} parent=0 // loop_exit
    _

// kernel: residual_block.3
$region0: #{residual_block.3}
  #allocation0 [shape = 'u32[]', space=smem, size = 0x4, offset = 0x4, fixed_abs, tag = 'smem constant byte address 0x4 - core index']
  #allocation1 [shape = 'u32[144,128]{1,0:T(1,128)}', space=vmem, size = 0x12000, scoped, tag = 'internal scratch']
  #allocation2 [shape = 'f32[36,256]{1,0:T(8,128)}', space=vmem, size = 0xa000, scoped, tag = 'scratch operand']
  %s0 = inlined_call_operand.vmem [shape: f32[2,4,256], index: 0, kind: input, shape index: {}]
  %s1 = inlined_call_operand.vmem [shape: f32[4,36], index: 1, kind: input, shape index: {}]
  %s2 = inlined_call_operand.vmem [shape: f32[2,4,256], index: 2, kind: output, shape index: {0}]
  %s3 = inlined_call_operand.vmem [shape: f32[2,4,1], index: 3, kind: output, shape index: {1}]
  %s4 = inlined_call_operand.vmem [shape: f32[2,4,1], index: 4, kind: output, shape index: {2}]
  %5 = xla_tuple %s2, %s3, %s4
  %s6 = sld [smem:[#allocation0]]
  $region57: #{residual_block.3} parent=0
    _
  %s8 = ssub.s32 1, %s6
  %s9 = scalar_select 0, %s8, %s6
  loop: start=0, step=1, limit=4
  $region2: #{residual_block.3} parent=0 // loop_pre_header
    _
  $region3: #{residual_block.3} parent=0 // loop_header
    %s11 = sphi 0, %s15
    %p12 = scmp.ge.s32.totalorder %s11, 4
    %s21 = sphi 0, %s23
    %s24 = sphi 0, %s21
    %s25 = sphi 0, %s24
    %s41 = sphi 0, %s25
    %s45 = sphi 0, %s45
    %s47 = sphi 0, %s45
    %s48 = sphi 0, %s47
    %s62 = sphi 0, %s48
    %s68 = sphi 0, %s70
    %s71 = sphi 0, %s68
    %s72 = sphi 0, %s71
    %s88 = sphi 0, %s72
    %s94 = sphi 0, %s96
    %s97 = sphi 0, %s94
    %s98 = sphi 0, %s97
    %s114 = sphi 0, %s98
    %s120 = sphi 0, %s122
    %s123 = sphi 0, %s120
    %s124 = sphi 0, %s123
    %s140 = sphi 0, %s124
  $region4: #{residual_block.3} parent=0 // loop_header_branch
    %14 = sbr.rel (%p12) target = $region8
  $region5: #{residual_block.3} parent=0 // loop_body
    %s16 = ssub.s32 %s11, 1
    %s17 = ssub.s32 %s11, 2
    %s18 = sadd.s32 %s11, 1
    %s19 = ssub.s32 %s11, %s18
    %p20 = scmp.eq.s32.totalorder %s19, 0
    %s22 = sadd.s32 %s21, 1
    %s23 = scalar_select %p20, %s21, %s22
    %p26 = pneg %p20
    %p27 = scmp.eq.s32.totalorder %s11, 1
    %p28 = por %p26, %p27
    %p29 = scmp.ne.s32.totalorder %s21, %s24
    %p30 = scmp.eq.s32.totalorder %s11, 0
    %p31 = por %p29, %p30
    %p32 = scmp.ne.s32.totalorder %s21, %s24
    %p33 = scmp.eq.s32.totalorder %s16, 1
    %p34 = por %p32, %p33
    %p35 = scmp.ne.s32.totalorder %s24, %s25
    %p36 = scmp.eq.s32.totalorder %s16, 0
    %p37 = por %p35, %p36
    %p38 = scmp.ne.s32.totalorder %s24, %s25
    %p39 = scmp.eq.s32.totalorder %s17, 1
    %p40 = por %p38, %p39
    %p42 = scmp.ne.s32.totalorder %s25, %s41
    %p43 = scmp.eq.s32.totalorder %s17, 0
    %p44 = por %p42, %p43
    %s46 = sadd.s32 %s45, 1
    %p49 = scmp.eq.s32.totalorder %s11, 1
    %p50 = scmp.ne.s32.totalorder %s45, %s47
    %p51 = scmp.eq.s32.totalorder %s11, 0
    %p52 = por %p50, %p51
    %p53 = scmp.ne.s32.totalorder %s45, %s47
    %p54 = scmp.eq.s32.totalorder %s16, 1
    %p55 = por %p53, %p54
    %p56 = scmp.ne.s32.totalorder %s47, %s48
    %p57 = scmp.eq.s32.totalorder %s16, 0
    %p58 = por %p56, %p57
    %p59 = scmp.ne.s32.totalorder %s47, %s48
    %p60 = scmp.eq.s32.totalorder %s17, 1
    %p61 = por %p59, %p60
    %p63 = scmp.ne.s32.totalorder %s48, %s62
    %p64 = scmp.eq.s32.totalorder %s17, 0
    %p65 = por %p63, %p64
    %s66 = ssub.s32 %s11, %s18
    %p67 = scmp.eq.s32.totalorder %s66, 0
    %s69 = sadd.s32 %s68, 1
    %s70 = scalar_select %p67, %s68, %s69
    %p73 = pneg %p67
    %p74 = scmp.eq.s32.totalorder %s11, 1
    %p75 = por %p73, %p74
    %p76 = scmp.ne.s32.totalorder %s68, %s71
    %p77 = scmp.eq.s32.totalorder %s11, 0
    %p78 = por %p76, %p77
    %p79 = scmp.ne.s32.totalorder %s68, %s71
    %p80 = scmp.eq.s32.totalorder %s16, 1
    %p81 = por %p79, %p80
    %p82 = scmp.ne.s32.totalorder %s71, %s72
    %p83 = scmp.eq.s32.totalorder %s16, 0
    %p84 = por %p82, %p83
    %p85 = scmp.ne.s32.totalorder %s71, %s72
    %p86 = scmp.eq.s32.totalorder %s17, 1
    %p87 = por %p85, %p86
    %p89 = scmp.ne.s32.totalorder %s72, %s88
    %p90 = scmp.eq.s32.totalorder %s17, 0
    %p91 = por %p89, %p90
    %s92 = ssub.s32 %s11, %s18
    %p93 = scmp.eq.s32.totalorder %s92, 0
    %s95 = sadd.s32 %s94, 1
    %s96 = scalar_select %p93, %s94, %s95
    %p99 = pneg %p93
    %p100 = scmp.eq.s32.totalorder %s11, 1
    %p101 = por %p99, %p100
    %p102 = scmp.ne.s32.totalorder %s94, %s97
    %p103 = scmp.eq.s32.totalorder %s11, 0
    %p104 = por %p102, %p103
    %p105 = scmp.ne.s32.totalorder %s94, %s97
    %p106 = scmp.eq.s32.totalorder %s16, 1
    %p107 = por %p105, %p106
    %p108 = scmp.ne.s32.totalorder %s97, %s98
    %p109 = scmp.eq.s32.totalorder %s16, 0
    %p110 = por %p108, %p109
    %p111 = scmp.ne.s32.totalorder %s97, %s98
    %p112 = scmp.eq.s32.totalorder %s17, 1
    %p113 = por %p111, %p112
    %p115 = scmp.ne.s32.totalorder %s98, %s114
    %p116 = scmp.eq.s32.totalorder %s17, 0
    %p117 = por %p115, %p116
    %s118 = ssub.s32 %s11, %s18
    %p119 = scmp.eq.s32.totalorder %s118, 0
    %s121 = sadd.s32 %s120, 1
    %s122 = scalar_select %p119, %s120, %s121
    %p125 = pneg %p119
    %p126 = scmp.eq.s32.totalorder %s11, 1
    %p127 = por %p125, %p126
    %p128 = scmp.ne.s32.totalorder %s120, %s123
    %p129 = scmp.eq.s32.totalorder %s11, 0
    %p130 = por %p128, %p129
    %p131 = scmp.ne.s32.totalorder %s120, %s123
    %p132 = scmp.eq.s32.totalorder %s16, 1
    %p133 = por %p131, %p132
    %p134 = scmp.ne.s32.totalorder %s123, %s124
    %p135 = scmp.eq.s32.totalorder %s16, 0
    %p136 = por %p134, %p135
    %p137 = scmp.ne.s32.totalorder %s123, %s124
    %p138 = scmp.eq.s32.totalorder %s17, 1
    %p139 = por %p137, %p138
    %p141 = scmp.ne.s32.totalorder %s124, %s140
    %p142 = scmp.eq.s32.totalorder %s17, 0
    %p143 = por %p141, %p142
    %p144 = scmp.le.s32.totalorder 1, %s11
    %p145 = scmp.lt.s32.totalorder %s11, 3
    %p146 = pnand %p144, %p145
    %p147 = pneg %p146
    // Predicated region
    $region9: #{residual_block.3} parent=5 // pred_check
      _
    $region10: #{residual_block.3} parent=5 // pred_check_branch
      %149 = sbr.rel (%p146) target = $region12
    $region11: #{residual_block.3} parent=5 // pred_region
      %s150 = ssub.s32 %s11, 1
      // Predicated region
      $region13: #{residual_block.3} parent=11 // pred_check
        %p151 = pneg %p58
      $region14: #{residual_block.3} parent=11 // pred_check_branch
        %153 = sbr.rel (%p151) target = $region16
      $region15: #{residual_block.3} parent=11 // pred_region
        _
      $region16: #{residual_block.3} parent=11 // pred_fallthru
        _
    $region12: #{residual_block.3} parent=5 // pred_fallthru
      _
    %p154 = scmp.lt.s32.totalorder %s11, 2
    // Predicated region
    $region17: #{residual_block.3} parent=5 // pred_check
      %p155 = pneg %p154
    $region18: #{residual_block.3} parent=5 // pred_check_branch
      %157 = sbr.rel (%p155) target = $region20
    $region19: #{residual_block.3} parent=5 // pred_region
      // Predicated region
      $region21: #{residual_block.3} parent=19 // pred_check
        %p158 = pneg %p31
      $region22: #{residual_block.3} parent=19 // pred_check_branch
        %160 = sbr.rel (%p158) target = $region24
      $region23: #{residual_block.3} parent=19 // pred_region
        %p161 = scmp.lt.s32.totalorder %s11, 1
        %s162 = scalar_select %p161, %s11, 1
        %s163 = smul.addr %s162, 2
        %s164 = smul.addr %s163, 4
        %s165 = scalar_lea.vmem %s0, %s164
      $region24: #{residual_block.3} parent=19 // pred_fallthru
        _
    $region20: #{residual_block.3} parent=5 // pred_fallthru
      _
    %p166 = scmp.le.s32.totalorder 1, %s11
    %p167 = scmp.lt.s32.totalorder %s11, 3
    %p168 = pnand %p166, %p167
    %p169 = pneg %p168
    // Predicated region
    $region25: #{residual_block.3} parent=5 // pred_check
      _
    $region26: #{residual_block.3} parent=5 // pred_check_branch
      %171 = sbr.rel (%p168) target = $region28
    $region27: #{residual_block.3} parent=5 // pred_region
      %s172 = ssub.s32 %s11, 1
      %p173 = scmp.lt.s32.totalorder %s16, 1
      %s174 = scalar_select %p173, %s16, 1
      %s175 = smul.addr %s174, 2
      %s176 = smul.addr %s175, 4
      %s177 = scalar_lea.vmem %s0, %s176
      %p178 = pneg %p37
      %p179 = pneg %p34
      %p180 = pneg %p58
      %p181 = pneg %p55
      %p182 = pneg %p84
      %p183 = pneg %p81
      %p184 = scmp.lt.s32.totalorder %s16, 1
      %s185 = scalar_select %p184, %s16, 1
      %s186 = smul.addr %s185, 2
      %s187 = smul.addr %s186, 4
      %s188 = scalar_lea.vmem %s2, %s187
      %p189 = pneg %p110
      %p190 = pneg %p107
      %p191 = scmp.lt.s32.totalorder %s16, 1
      %s192 = scalar_select %p191, %s16, 1
      %s193 = smul.addr %s192, 4
      %s194 = scalar_lea.vmem %s3, %s193
      %p195 = pneg %p136
      %p196 = pneg %p133
      %p197 = scmp.lt.s32.totalorder %s16, 1
      %s198 = scalar_select %p197, %s16, 1
      %s199 = smul.addr %s198, 4
      %s200 = scalar_lea.vmem %s4, %s199
      %p201 = scmp.lt.s32.totalorder %s16, 1
      %s202 = scalar_select %p201, %s16, 1
      %s203 = smul.addr %s202, 2
      %s204 = smul.addr %s203, 4
      %s205 = scalar_lea.vmem %s0, %s204
      %p206 = scmp.lt.s32.totalorder %s16, 1
      %s207 = scalar_select %p206, %s16, 1
      %s208 = smul.addr %s207, 2
      %s209 = smul.addr %s208, 4
      %s210 = scalar_lea.vmem %s2, %s209
      %p211 = scmp.lt.s32.totalorder %s16, 1
      %s212 = scalar_select %p211, %s16, 1
      %s213 = smul.addr %s212, 4
      %s214 = scalar_lea.vmem %s3, %s213
      %p215 = scmp.lt.s32.totalorder %s16, 1
      %s216 = scalar_select %p215, %s16, 1
      %s217 = smul.addr %s216, 4
      %s218 = scalar_lea.vmem %s4, %s217
      %v219 = vld [vmem:[%s205] sm:$0xff]
      %v220 = vlaneseq
      %v221 = vand.u32 %v220, 127
      %v222 = vadd.s32 %v221, 128
      %vm223 = vcmp.lt.s32.totalorder %v221, 0
      %v224 = vsub.s32 0, %v221
      %v225 = vsel %vm223, %v224, %v221
      %v226 = vshrl.u32 %v225, 4
      %v227 = vand.u32 %v225, 15
      %v228 = vsub.s32 0, %v227
      %v229 = vsel %vm223, %v228, %v227
      %vm230 = vcmp.lt.s32.totalorder %v222, 0
      %v231 = vsub.s32 0, %v222
      %v232 = vsel %vm230, %v231, %v222
      %v233 = vshrl.u32 %v232, 4
      %v234 = vand.u32 %v232, 15
      %v235 = vsub.s32 0, %v234
      %v236 = vsel %vm230, %v235, %v234
      %vm237 = vcmp.ne.s32.totalorder %v229, 0
      %vm238 = vcmp.ne.s32.totalorder %v236, 0
      %vm239 = vcmp.lt.s32.totalorder %v229, 0
      %vm240 = vcmp.lt.s32.totalorder %v236, 0
      %vm241 = vmand %vm239, %vm237
      %vm242 = vmand %vm240, %vm238
      %v243 = vadd.s32 %v229, 16
      %v244 = vadd.s32 %v236, 16
      %v245 = vsel %vm241, %v243, %v229
      %v246 = vsel %vm242, %v244, %v236
      %247 = vst [vmem:[#allocation2] sm:$0xff] 0.0
      %248 = vst [vmem:[#allocation2 + $0x8] sm:$0xff] 0.0
      %249 = vst [vmem:[#allocation2 + $0x10] sm:$0xff] 0.0
      %250 = vst [vmem:[#allocation2 + $0x18] sm:$0xff] 0.0
      %251 = vst [vmem:[#allocation2 + $0x20] sm:$0xff] 0.0
      %252 = vst [vmem:[#allocation2 + $0x28] sm:$0xff] 0.0
      %253 = vst [vmem:[#allocation2 + $0x30] sm:$0xff] 0.0
      %254 = vst [vmem:[#allocation2 + $0x38] sm:$0xff] 0.0
      %255 = vst [vmem:[#allocation2 + $0x40] sm:$0xf] 0.0
      %256 = vst [vmem:[#allocation2 + $0x48] sm:$0xf] 0.0
      %vm257 = vcmp.ge.s32.totalorder %v245, 1
      %vm258 = vcmp.ge.s32.totalorder %v246, 1
      %v260 = vcombine.high %v219, %v219
      %261 = vrot.lane.b32.xlu0 %v219, 17
      %v262 = vpop.permute.xlu0 %261
      %263 = vrot.lane.b32.xlu0 %v260, 17
      %v264 = vpop.permute.xlu0 %263
      %vm265 = vcmask 138240
      %v266 = vsel %vm265, %v262, %v264
      %v269 = vsel %vm257, %v262, 0.0
      %v270 = vsel %vm258, %v266, 0.0
      %vm271 = vcmask 1043592
      %272 = vst.msk [vmem:[#allocation2] sm:$0xf] %vm271, %v269
      %273 = vst [vmem:[#allocation2 + $0x8] sm:$0xf] %v270
      %v274 = vcombine.low %v219, %v219
      %275 = vrot.lane.b32.xlu0 %v274, 16
      %v276 = vpop.permute.xlu0 %275
      %277 = vrot.lane.b32.xlu0 %v219, 16
      %v278 = vpop.permute.xlu0 %277
      %vm279 = vcmask 130048
      %v280 = vsel %vm279, %v276, %v278
      %vm283 = vcmask 1047684
      %284 = vst.msk [vmem:[#allocation2] sm:$0xf0] %vm283, %v276
      %285 = vst [vmem:[#allocation2 + $0x8] sm:$0xf0] %v280
      %vm286 = vcmp.le.s32.totalorder %v245, 14
      %vm287 = vcmp.le.s32.totalorder %v246, 14
      %288 = vrot.lane.b32.xlu0 %v219, 15
      %v289 = vpop.permute.xlu0 %288
      %290 = vrot.lane.b32.xlu0 %v260, 15
      %v291 = vpop.permute.xlu0 %290
      %vm292 = vcmask 121856
      %v293 = vsel %vm292, %v289, %v291
      %v296 = vsel %vm286, %v289, 0.0
      %v297 = vsel %vm287, %v293, 0.0
      %vm298 = vcmask 1043576
      %299 = vst.msk [vmem:[#allocation2 + $0x10] sm:$0xf] %vm298, %v296
      %300 = vst [vmem:[#allocation2 + $0x18] sm:$0xf] %v297
      %301 = vrot.lane.b32.xlu0 %v219, 1
      %v302 = vpop.permute.xlu0 %301
      %303 = vrot.lane.b32.xlu0 %v260, 1
      %v304 = vpop.permute.xlu0 %303
      %vm305 = vcmask 7168
      %v306 = vsel %vm305, %v302, %v304
      %v309 = vsel %vm257, %v302, 0.0
      %v310 = vsel %vm258, %v306, 0.0
      %v313 = vrot.slane %v309, 4
      %v314 = vrot.slane %v310, 4
      %vm317 = vcmask 1047564
      %318 = vst.msk [vmem:[#allocation2 + $0x10] sm:$0xf0] %vm317, %v313
      %319 = vst [vmem:[#allocation2 + $0x18] sm:$0xf0] %v314
      %321 = vst [vmem:[#allocation2 + $0x20] sm:$0xf] %v219
      %322 = vst [vmem:[#allocation2 + $0x28] sm:$0xf] %v260
      %323 = vrot.lane.b32.xlu0 %v219, 127
      %v324 = vpop.permute.xlu0 %323
      %325 = vrot.lane.b32.xlu0 %v260, 127
      %v326 = vpop.permute.xlu0 %325
      %vm327 = vcmask 1039360
      %v328 = vsel %vm327, %v324, %v326
      %v331 = vsel %vm286, %v328, 0.0
      %v332 = vsel %vm287, %v326, 0.0
      %v335 = vrot.slane %v331, 4
      %v336 = vrot.slane %v332, 4
      %339 = vst [vmem:[#allocation2 + $0x20] sm:$0xf0] %v335
      %vm340 = vcmask 1039364
      %341 = vst.msk [vmem:[#allocation2 + $0x28] sm:$0xf0] %vm340, %v336
      %342 = vrot.lane.b32.xlu0 %v219, 113
      %v343 = vpop.permute.xlu0 %342
      %344 = vrot.lane.b32.xlu0 %v260, 113
      %v345 = vpop.permute.xlu0 %344
      %vm346 = vcmask 924672
      %v347 = vsel %vm346, %v343, %v345
      %v350 = vsel %vm257, %v347, 0.0
      %v351 = vsel %vm258, %v345, 0.0
      %352 = vst [vmem:[#allocation2 + $0x30] sm:$0xf] %v350
      %vm353 = vcmask 920576
      %354 = vst.msk [vmem:[#allocation2 + $0x38] sm:$0xf] %vm353, %v351
      %355 = vrot.lane.b32.xlu0 %v274, 112
      %v356 = vpop.permute.xlu0 %355
      %357 = vrot.lane.b32.xlu0 %v219, 112
      %v358 = vpop.permute.xlu0 %357
      %vm359 = vcmask 916480
      %v360 = vsel %vm359, %v356, %v358
      %363 = vst [vmem:[#allocation2 + $0x30] sm:$0xf0] %v360
      %vm364 = vcmask 916484
      %365 = vst.msk [vmem:[#allocation2 + $0x38] sm:$0xf0] %vm364, %v358
      %366 = vrot.lane.b32.xlu0 %v219, 111
      %v367 = vpop.permute.xlu0 %366
      %368 = vrot.lane.b32.xlu0 %v260, 111
      %v369 = vpop.permute.xlu0 %368
      %vm370 = vcmask 908288
      %v371 = vsel %vm370, %v367, %v369
      %v374 = vsel %vm286, %v371, 0.0
      %v375 = vsel %vm287, %v369, 0.0
      %376 = vst [vmem:[#allocation2 + $0x40] sm:$0xf] %v374
      %vm377 = vcmask 904192
      %378 = vst.msk [vmem:[#allocation2 + $0x48] sm:$0xf] %vm377, %v375
      %v379 = vld [vmem:[%s1] sm:$0xf]
      %v380 = vld [vmem:[#allocation2] sm:$0xff]
      %v381 = vld [vmem:[#allocation2 + $0x8] sm:$0xff]
      %v382 = vld [vmem:[#allocation2 + $0x10] sm:$0xff]
      %v383 = vld [vmem:[#allocation2 + $0x18] sm:$0xff]
      %v384 = vld [vmem:[#allocation2 + $0x20] sm:$0xff]
      %v385 = vld [vmem:[#allocation2 + $0x28] sm:$0xff]
      %v386 = vld [vmem:[#allocation2 + $0x30] sm:$0xff]
      %v387 = vld [vmem:[#allocation2 + $0x38] sm:$0xff]
      %v388 = vld [vmem:[#allocation2 + $0x40] sm:$0xf]
      %v389 = vld [vmem:[#allocation2 + $0x48] sm:$0xf]
      %vm390 = vcmask 293888
      %v392 = vsel %vm390, %v379, 0
      %vm394 = vcmask 1043456
      %v396 = vsel %vm394, %v388, 0
      %v399 = vsel %vm394, %v389, 0
      %401 = vmatprep.subr.mxu0 0.0
      %402 = vmatpush1.msra.mxu0 0.0
      %403 = vmatprep.subr.mxu0 0.0
      %404 = vmatpush1.msra.mxu0 0.0
      %405 = vmatprep.subr.mxu0 0.0
      %406 = vmatpush1.msra.mxu0 0.0
      %407 = vmatprep.subr.mxu0 0.0
      %408 = vmatpush1.msra.mxu0 0.0
      %409 = vmatprep.subr.mxu0 0.0
      %410 = vmatpush1.msra.mxu0 0.0
      %411 = vmatprep.subr.mxu0 0.0
      %412 = vmatpush1.msra.mxu0 0.0
      %413 = vmatprep.subr.mxu0 0.0
      %414 = vmatpush1.msra.mxu0 0.0
      %415 = vmatprep.subr.mxu0 0.0
      %416 = vmatpush1.msra.mxu0 0.0
      %417 = vmatprep.subr.mxu0 0.0
      %418 = vmatpush1.msra.mxu0 0.0
      %419 = vmatprep.subr.mxu0 0.0
      %420 = vmatpush1.msra.mxu0 0.0
      %421 = vmatprep.subr.mxu0 0.0
      %422 = vmatpush1.msra.mxu0 0.0
      %423 = vmatprep.subr.mxu0 %v399
      %424 = vmatpush1.msra.mxu0 %v396
      %425 = vmatprep.subr.mxu0 %v387
      %426 = vmatpush1.msra.mxu0 %v386
      %427 = vmatprep.subr.mxu0 %v385
      %428 = vmatpush1.msra.mxu0 %v384
      %429 = vmatprep.subr.mxu0 %v383
      %430 = vmatpush1.msra.mxu0 %v382
      %431 = vmatprep.subr.mxu0 %v381
      %432 = vmatpush1.msra.mxu0 %v380
      %433 = vmatprep.subr.mxu0 0.0
      %434 = vmatpush2.msra.mxu0 0.0
      %435 = vmatprep.subr.mxu0 0.0
      %436 = vmatpush2.msra.mxu0 0.0
      %437 = vmatprep.subr.mxu0 0.0
      %438 = vmatpush2.msra.mxu0 0.0
      %439 = vmatprep.subr.mxu0 0.0
      %440 = vmatpush2.msra.mxu0 0.0
      %441 = vmatprep.subr.mxu0 0.0
      %442 = vmatpush2.msra.mxu0 0.0
      %443 = vmatprep.subr.mxu0 0.0
      %444 = vmatpush2.msra.mxu0 0.0
      %445 = vmatprep.subr.mxu0 0.0
      %446 = vmatpush2.msra.mxu0 0.0
      %447 = vmatprep.subr.mxu0 0.0
      %448 = vmatpush2.msra.mxu0 0.0
      %449 = vmatprep.subr.mxu0 0.0
      %450 = vmatpush2.msra.mxu0 0.0
      %451 = vmatprep.subr.mxu0 0.0
      %452 = vmatpush2.msra.mxu0 0.0
      %453 = vmatprep.subr.mxu0 0.0
      %454 = vmatpush2.msra.mxu0 0.0
      %455 = vmatprep.subr.mxu0 0.0
      %456 = vmatpush2.msra.mxu0 0.0
      %457 = vmatprep.subr.mxu0 0.0
      %458 = vmatpush2.msra.mxu0 0.0
      %459 = vmatprep.subr.mxu0 0.0
      %460 = vmatpush2.msra.mxu0 0.0
      %461 = vmatprep.subr.mxu0 0.0
      %462 = vmatpush2.msra.mxu0 0.0
      %463 = vmatprep.subr.mxu0 0.0
      %464 = vmatpush2.msra.mxu0 0.0
      %465 = vmatprep.mubr.f32.mxu0 0.0
      %466 = vmatmul.mubr.f32.gmra.mxu0 %v392
      %v467 = vpop.f32.mrf.mxu0
      %v468 = vadd.f32 0.0, %v467
      %v469 = vpop.f32.mrf.mxu0
      %v470 = vadd.f32 0.0, %v469
      %471 = vdwg.mxu0
      %v474 = vcombine.low %v468, %v470
      %476 = vst [vmem:[%s210] sm:$0xff] %v474
      %v477 = vsel %vm394, %v468, 0.0
      %v478 = vsel %vm394, %v470, 0.0
      %v479 = vadd.f32 %v477, %v478
      %480 = vadd.xlane.f32.xlu0 %v479
      %v481 = vpop.xlane.xlu0 %480
      %vm482 = vcmask 3072
      %483 = vst.msk [vmem:[%s214] sm:$0xf] %vm482, %v481
      %v484 = vmul.f32 %v468, %v468
      %v485 = vmul.f32 %v470, %v470
      %v486 = vsel %vm394, %v484, 0.0
      %v487 = vsel %vm394, %v485, 0.0
      %v488 = vadd.f32 %v486, %v487
      %489 = vadd.xlane.f32.xlu0 %v488
      %v490 = vpop.xlane.xlu0 %489
      %491 = vst.msk [vmem:[%s218] sm:$0xf] %vm482, %v490
      %p492 = scmp.lt.s32.totalorder %s16, 1
      %s493 = scalar_select %p492, %s16, 1
      %s494 = smul.addr %s493, 2
      %s495 = smul.addr %s494, 4
      %s496 = scalar_lea.vmem %s2, %s495
      %p497 = scmp.lt.s32.totalorder %s16, 1
      %s498 = scalar_select %p497, %s16, 1
      %s499 = smul.addr %s498, 4
      %s500 = scalar_lea.vmem %s3, %s499
      %p501 = scmp.lt.s32.totalorder %s16, 1
      %s502 = scalar_select %p501, %s16, 1
      %s503 = smul.addr %s502, 4
      %s504 = scalar_lea.vmem %s4, %s503
      // Predicated region
      $region29: #{residual_block.3} parent=27 // pred_check
        %p505 = pneg %p81
      $region30: #{residual_block.3} parent=27 // pred_check_branch
        %507 = sbr.rel (%p505) target = $region32
      $region31: #{residual_block.3} parent=27 // pred_region
        _
      $region32: #{residual_block.3} parent=27 // pred_fallthru
        _
      // Predicated region
      $region33: #{residual_block.3} parent=27 // pred_check
        %p508 = pneg %p107
      $region34: #{residual_block.3} parent=27 // pred_check_branch
        %510 = sbr.rel (%p508) target = $region36
      $region35: #{residual_block.3} parent=27 // pred_region
        _
      $region36: #{residual_block.3} parent=27 // pred_fallthru
        _
      // Predicated region
      $region37: #{residual_block.3} parent=27 // pred_check
        %p511 = pneg %p133
      $region38: #{residual_block.3} parent=27 // pred_check_branch
        %513 = sbr.rel (%p511) target = $region40
      $region39: #{residual_block.3} parent=27 // pred_region
        _
      $region40: #{residual_block.3} parent=27 // pred_fallthru
        _
    $region28: #{residual_block.3} parent=5 // pred_fallthru
      _
    %p514 = scmp.le.s32.totalorder 2, %s11
    // Predicated region
    $region41: #{residual_block.3} parent=5 // pred_check
      %p515 = pneg %p514
    $region42: #{residual_block.3} parent=5 // pred_check_branch
      %517 = sbr.rel (%p515) target = $region44
    $region43: #{residual_block.3} parent=5 // pred_region
      %s518 = ssub.s32 %s11, 2
      // Predicated region
      $region45: #{residual_block.3} parent=43 // pred_check
        %p519 = pneg %p87
      $region46: #{residual_block.3} parent=43 // pred_check_branch
        %521 = sbr.rel (%p519) target = $region48
      $region47: #{residual_block.3} parent=43 // pred_region
        %p522 = scmp.lt.s32.totalorder %s17, 1
        %s523 = scalar_select %p522, %s17, 1
        %s524 = smul.addr %s523, 2
        %s525 = smul.addr %s524, 4
        %s526 = scalar_lea.vmem %s2, %s525
      $region48: #{residual_block.3} parent=43 // pred_fallthru
        _
      // Predicated region
      $region49: #{residual_block.3} parent=43 // pred_check
        %p527 = pneg %p113
      $region50: #{residual_block.3} parent=43 // pred_check_branch
        %529 = sbr.rel (%p527) target = $region52
      $region51: #{residual_block.3} parent=43 // pred_region
        %p530 = scmp.lt.s32.totalorder %s17, 1
        %s531 = scalar_select %p530, %s17, 1
        %s532 = smul.addr %s531, 4
        %s533 = scalar_lea.vmem %s3, %s532
      $region52: #{residual_block.3} parent=43 // pred_fallthru
        _
      // Predicated region
      $region53: #{residual_block.3} parent=43 // pred_check
        %p534 = pneg %p139
      $region54: #{residual_block.3} parent=43 // pred_check_branch
        %536 = sbr.rel (%p534) target = $region56
      $region55: #{residual_block.3} parent=43 // pred_region
        %p537 = scmp.lt.s32.totalorder %s17, 1
        %s538 = scalar_select %p537, %s17, 1
        %s539 = smul.addr %s538, 4
        %s540 = scalar_lea.vmem %s4, %s539
      $region56: #{residual_block.3} parent=43 // pred_fallthru
        _
    $region44: #{residual_block.3} parent=5 // pred_fallthru
      _
  $region6: #{residual_block.3} parent=0 // loop_footer
    %s15 = sadd.s32 1, %s11
  $region7: #{residual_block.3} parent=0 // loop_footer_branch
    %10 = sbr.rel target = $region3
  $region8: #{residual_block.3} parent=0 // loop_exit
    _

// kernel: residual_block.4
$region0: #{residual_block.4}
  #allocation0 [shape = 'u32[]', space=smem, size = 0x4, offset = 0x4, fixed_abs, tag = 'smem constant byte address 0x4 - core index']
  #allocation1 [shape = 'u32[144,128]{1,0:T(1,128)}', space=vmem, size = 0x12000, scoped, tag = 'internal scratch']
  #allocation2 [shape = 'f32[36,256]{1,0:T(8,128)}', space=vmem, size = 0xa000, scoped, tag = 'scratch operand']
  %s0 = inlined_call_operand.vmem [shape: f32[2,4,256], index: 0, kind: input, shape index: {}]
  %s1 = inlined_call_operand.vmem [shape: f32[4,1], index: 1, kind: input, shape index: {}]
  %s2 = inlined_call_operand.vmem [shape: f32[4,1], index: 2, kind: input, shape index: {}]
  %s3 = inlined_call_operand.vmem [shape: f32[4,36], index: 3, kind: input, shape index: {}]
  %s4 = inlined_call_operand.vmem [shape: f32[2,4,256], index: 4, kind: output, shape index: {0}]
  %s5 = inlined_call_operand.vmem [shape: f32[2,4,1], index: 5, kind: output, shape index: {1}]
  %s6 = inlined_call_operand.vmem [shape: f32[2,4,1], index: 6, kind: output, shape index: {2}]
  %7 = xla_tuple %s4, %s5, %s6
  %s8 = sld [smem:[#allocation0]]
  $region65: #{residual_block.4} parent=0
    _
  %s10 = ssub.s32 1, %s8
  %s11 = scalar_select 0, %s10, %s8
  loop: start=0, step=1, limit=4
  $region2: #{residual_block.4} parent=0 // loop_pre_header
    _
  $region3: #{residual_block.4} parent=0 // loop_header
    %s13 = sphi 0, %s17
    %p14 = scmp.ge.s32.totalorder %s13, 4
    %s23 = sphi 0, %s25
    %s26 = sphi 0, %s23
    %s27 = sphi 0, %s26
    %s43 = sphi 0, %s27
    %s47 = sphi 0, %s47
    %s49 = sphi 0, %s47
    %s50 = sphi 0, %s49
    %s64 = sphi 0, %s50
    %s68 = sphi 0, %s68
    %s70 = sphi 0, %s68
    %s71 = sphi 0, %s70
    %s85 = sphi 0, %s71
    %s89 = sphi 0, %s89
    %s91 = sphi 0, %s89
    %s92 = sphi 0, %s91
    %s106 = sphi 0, %s92
    %s112 = sphi 0, %s114
    %s115 = sphi 0, %s112
    %s116 = sphi 0, %s115
    %s132 = sphi 0, %s116
    %s138 = sphi 0, %s140
    %s141 = sphi 0, %s138
    %s142 = sphi 0, %s141
    %s158 = sphi 0, %s142
    %s164 = sphi 0, %s166
    %s167 = sphi 0, %s164
    %s168 = sphi 0, %s167
    %s184 = sphi 0, %s168
  $region4: #{residual_block.4} parent=0 // loop_header_branch
    %16 = sbr.rel (%p14) target = $region8
  $region5: #{residual_block.4} parent=0 // loop_body
    %s18 = ssub.s32 %s13, 1
    %s19 = ssub.s32 %s13, 2
    %s20 = sadd.s32 %s13, 1
    %s21 = ssub.s32 %s13, %s20
    %p22 = scmp.eq.s32.totalorder %s21, 0
    %s24 = sadd.s32 %s23, 1
    %s25 = scalar_select %p22, %s23, %s24
    %p28 = pneg %p22
    %p29 = scmp.eq.s32.totalorder %s13, 1
    %p30 = por %p28, %p29
    %p31 = scmp.ne.s32.totalorder %s23, %s26
    %p32 = scmp.eq.s32.totalorder %s13, 0
    %p33 = por %p31, %p32
    %p34 = scmp.ne.s32.totalorder %s23, %s26
    %p35 = scmp.eq.s32.totalorder %s18, 1
    %p36 = por %p34, %p35
    %p37 = scmp.ne.s32.totalorder %s26, %s27
    %p38 = scmp.eq.s32.totalorder %s18, 0
    %p39 = por %p37, %p38
    %p40 = scmp.ne.s32.totalorder %s26, %s27
    %p41 = scmp.eq.s32.totalorder %s19, 1
    %p42 = por %p40, %p41
    %p44 = scmp.ne.s32.totalorder %s27, %s43
    %p45 = scmp.eq.s32.totalorder %s19, 0
    %p46 = por %p44, %p45
    %s48 = sadd.s32 %s47, 1
    %p51 = scmp.eq.s32.totalorder %s13, 1
    %p52 = scmp.ne.s32.totalorder %s47, %s49
    %p53 = scmp.eq.s32.totalorder %s13, 0
    %p54 = por %p52, %p53
    %p55 = scmp.ne.s32.totalorder %s47, %s49
    %p56 = scmp.eq.s32.totalorder %s18, 1
    %p57 = por %p55, %p56
    %p58 = scmp.ne.s32.totalorder %s49, %s50
    %p59 = scmp.eq.s32.totalorder %s18, 0
    %p60 = por %p58, %p59
    %p61 = scmp.ne.s32.totalorder %s49, %s50
    %p62 = scmp.eq.s32.totalorder %s19, 1
    %p63 = por %p61, %p62
    %p65 = scmp.ne.s32.totalorder %s50, %s64
    %p66 = scmp.eq.s32.totalorder %s19, 0
    %p67 = por %p65, %p66
    %s69 = sadd.s32 %s68, 1
    %p72 = scmp.eq.s32.totalorder %s13, 1
    %p73 = scmp.ne.s32.totalorder %s68, %s70
    %p74 = scmp.eq.s32.totalorder %s13, 0
    %p75 = por %p73, %p74
    %p76 = scmp.ne.s32.totalorder %s68, %s70
    %p77 = scmp.eq.s32.totalorder %s18, 1
    %p78 = por %p76, %p77
    %p79 = scmp.ne.s32.totalorder %s70, %s71
    %p80 = scmp.eq.s32.totalorder %s18, 0
    %p81 = por %p79, %p80
    %p82 = scmp.ne.s32.totalorder %s70, %s71
    %p83 = scmp.eq.s32.totalorder %s19, 1
    %p84 = por %p82, %p83
    %p86 = scmp.ne.s32.totalorder %s71, %s85
    %p87 = scmp.eq.s32.totalorder %s19, 0
    %p88 = por %p86, %p87
    %s90 = sadd.s32 %s89, 1
    %p93 = scmp.eq.s32.totalorder %s13, 1
    %p94 = scmp.ne.s32.totalorder %s89, %s91
    %p95 = scmp.eq.s32.totalorder %s13, 0
    %p96 = por %p94, %p95
    %p97 = scmp.ne.s32.totalorder %s89, %s91
    %p98 = scmp.eq.s32.totalorder %s18, 1
    %p99 = por %p97, %p98
    %p100 = scmp.ne.s32.totalorder %s91, %s92
    %p101 = scmp.eq.s32.totalorder %s18, 0
    %p102 = por %p100, %p101
    %p103 = scmp.ne.s32.totalorder %s91, %s92
    %p104 = scmp.eq.s32.totalorder %s19, 1
    %p105 = por %p103, %p104
    %p107 = scmp.ne.s32.totalorder %s92, %s106
    %p108 = scmp.eq.s32.totalorder %s19, 0
    %p109 = por %p107, %p108
    %s110 = ssub.s32 %s13, %s20
    %p111 = scmp.eq.s32.totalorder %s110, 0
    %s113 = sadd.s32 %s112, 1
    %s114 = scalar_select %p111, %s112, %s113
    %p117 = pneg %p111
    %p118 = scmp.eq.s32.totalorder %s13, 1
    %p119 = por %p117, %p118
    %p120 = scmp.ne.s32.totalorder %s112, %s115
    %p121 = scmp.eq.s32.totalorder %s13, 0
    %p122 = por %p120, %p121
    %p123 = scmp.ne.s32.totalorder %s112, %s115
    %p124 = scmp.eq.s32.totalorder %s18, 1
    %p125 = por %p123, %p124
    %p126 = scmp.ne.s32.totalorder %s115, %s116
    %p127 = scmp.eq.s32.totalorder %s18, 0
    %p128 = por %p126, %p127
    %p129 = scmp.ne.s32.totalorder %s115, %s116
    %p130 = scmp.eq.s32.totalorder %s19, 1
    %p131 = por %p129, %p130
    %p133 = scmp.ne.s32.totalorder %s116, %s132
    %p134 = scmp.eq.s32.totalorder %s19, 0
    %p135 = por %p133, %p134
    %s136 = ssub.s32 %s13, %s20
    %p137 = scmp.eq.s32.totalorder %s136, 0
    %s139 = sadd.s32 %s138, 1
    %s140 = scalar_select %p137, %s138, %s139
    %p143 = pneg %p137
    %p144 = scmp.eq.s32.totalorder %s13, 1
    %p145 = por %p143, %p144
    %p146 = scmp.ne.s32.totalorder %s138, %s141
    %p147 = scmp.eq.s32.totalorder %s13, 0
    %p148 = por %p146, %p147
    %p149 = scmp.ne.s32.totalorder %s138, %s141
    %p150 = scmp.eq.s32.totalorder %s18, 1
    %p151 = por %p149, %p150
    %p152 = scmp.ne.s32.totalorder %s141, %s142
    %p153 = scmp.eq.s32.totalorder %s18, 0
    %p154 = por %p152, %p153
    %p155 = scmp.ne.s32.totalorder %s141, %s142
    %p156 = scmp.eq.s32.totalorder %s19, 1
    %p157 = por %p155, %p156
    %p159 = scmp.ne.s32.totalorder %s142, %s158
    %p160 = scmp.eq.s32.totalorder %s19, 0
    %p161 = por %p159, %p160
    %s162 = ssub.s32 %s13, %s20
    %p163 = scmp.eq.s32.totalorder %s162, 0
    %s165 = sadd.s32 %s164, 1
    %s166 = scalar_select %p163, %s164, %s165
    %p169 = pneg %p163
    %p170 = scmp.eq.s32.totalorder %s13, 1
    %p171 = por %p169, %p170
    %p172 = scmp.ne.s32.totalorder %s164, %s167
    %p173 = scmp.eq.s32.totalorder %s13, 0
    %p174 = por %p172, %p173
    %p175 = scmp.ne.s32.totalorder %s164, %s167
    %p176 = scmp.eq.s32.totalorder %s18, 1
    %p177 = por %p175, %p176
    %p178 = scmp.ne.s32.totalorder %s167, %s168
    %p179 = scmp.eq.s32.totalorder %s18, 0
    %p180 = por %p178, %p179
    %p181 = scmp.ne.s32.totalorder %s167, %s168
    %p182 = scmp.eq.s32.totalorder %s19, 1
    %p183 = por %p181, %p182
    %p185 = scmp.ne.s32.totalorder %s168, %s184
    %p186 = scmp.eq.s32.totalorder %s19, 0
    %p187 = por %p185, %p186
    %p188 = scmp.le.s32.totalorder 1, %s13
    %p189 = scmp.lt.s32.totalorder %s13, 3
    %p190 = pnand %p188, %p189
    %p191 = pneg %p190
    // Predicated region
    $region9: #{residual_block.4} parent=5 // pred_check
      _
    $region10: #{residual_block.4} parent=5 // pred_check_branch
      %193 = sbr.rel (%p190) target = $region12
    $region11: #{residual_block.4} parent=5 // pred_region
      %s194 = ssub.s32 %s13, 1
      // Predicated region
      $region13: #{residual_block.4} parent=11 // pred_check
        %p195 = pneg %p60
      $region14: #{residual_block.4} parent=11 // pred_check_branch
        %197 = sbr.rel (%p195) target = $region16
      $region15: #{residual_block.4} parent=11 // pred_region
        _
      $region16: #{residual_block.4} parent=11 // pred_fallthru
        _
      // Predicated region
      $region17: #{residual_block.4} parent=11 // pred_check
        %p198 = pneg %p81
      $region18: #{residual_block.4} parent=11 // pred_check_branch
        %200 = sbr.rel (%p198) target = $region20
      $region19: #{residual_block.4} parent=11 // pred_region
        _
      $region20: #{residual_block.4} parent=11 // pred_fallthru
        _
      // Predicated region
      $region21: #{residual_block.4} parent=11 // pred_check
        %p201 = pneg %p102
      $region22: #{residual_block.4} parent=11 // pred_check_branch
        %203 = sbr.rel (%p201) target = $region24
      $region23: #{residual_block.4} parent=11 // pred_region
        _
      $region24: #{residual_block.4} parent=11 // pred_fallthru
        _
    $region12: #{residual_block.4} parent=5 // pred_fallthru
      _
    %p204 = scmp.lt.s32.totalorder %s13, 2
    // Predicated region
    $region25: #{residual_block.4} parent=5 // pred_check
      %p205 = pneg %p204
    $region26: #{residual_block.4} parent=5 // pred_check_branch
      %207 = sbr.rel (%p205) target = $region28
    $region27: #{residual_block.4} parent=5 // pred_region
      // Predicated region
      $region29: #{residual_block.4} parent=27 // pred_check
        %p208 = pneg %p33
      $region30: #{residual_block.4} parent=27 // pred_check_branch
        %210 = sbr.rel (%p208) target = $region32
      $region31: #{residual_block.4} parent=27 // pred_region
        %p211 = scmp.lt.s32.totalorder %s13, 1
        %s212 = scalar_select %p211, %s13, 1
        %s213 = smul.addr %s212, 2
        %s214 = smul.addr %s213, 4
        %s215 = scalar_lea.vmem %s0, %s214
      $region32: #{residual_block.4} parent=27 // pred_fallthru
        _
    $region28: #{residual_block.4} parent=5 // pred_fallthru
      _
    %p216 = scmp.le.s32.totalorder 1, %s13
    %p217 = scmp.lt.s32.totalorder %s13, 3
    %p218 = pnand %p216, %p217
    %p219 = pneg %p218
    // Predicated region
    $region33: #{residual_block.4} parent=5 // pred_check
      _
    $region34: #{residual_block.4} parent=5 // pred_check_branch
      %221 = sbr.rel (%p218) target = $region36
    $region35: #{residual_block.4} parent=5 // pred_region
      %s222 = ssub.s32 %s13, 1
      %p223 = scmp.lt.s32.totalorder %s18, 1
      %s224 = scalar_select %p223, %s18, 1
      %s225 = smul.addr %s224, 2
      %s226 = smul.addr %s225, 4
      %s227 = scalar_lea.vmem %s0, %s226
      %p228 = pneg %p39
      %p229 = pneg %p36
      %p230 = pneg %p60
      %p231 = pneg %p57
      %p232 = pneg %p81
      %p233 = pneg %p78
      %p234 = pneg %p102
      %p235 = pneg %p99
      %p236 = pneg %p128
      %p237 = pneg %p125
      %p238 = scmp.lt.s32.totalorder %s18, 1
      %s239 = scalar_select %p238, %s18, 1
      %s240 = smul.addr %s239, 2
      %s241 = smul.addr %s240, 4
      %s242 = scalar_lea.vmem %s4, %s241
      %p243 = pneg %p154
      %p244 = pneg %p151
      %p245 = scmp.lt.s32.totalorder %s18, 1
      %s246 = scalar_select %p245, %s18, 1
      %s247 = smul.addr %s246, 4
      %s248 = scalar_lea.vmem %s5, %s247
      %p249 = pneg %p180
      %p250 = pneg %p177
      %p251 = scmp.lt.s32.totalorder %s18, 1
      %s252 = scalar_select %p251, %s18, 1
      %s253 = smul.addr %s252, 4
      %s254 = scalar_lea.vmem %s6, %s253
      %p255 = scmp.lt.s32.totalorder %s18, 1
      %s256 = scalar_select %p255, %s18, 1
      %s257 = smul.addr %s256, 2
      %s258 = smul.addr %s257, 4
      %s259 = scalar_lea.vmem %s0, %s258
      %p260 = scmp.lt.s32.totalorder %s18, 1
      %s261 = scalar_select %p260, %s18, 1
      %s262 = smul.addr %s261, 2
      %s263 = smul.addr %s262, 4
      %s264 = scalar_lea.vmem %s4, %s263
      %p265 = scmp.lt.s32.totalorder %s18, 1
      %s266 = scalar_select %p265, %s18, 1
      %s267 = smul.addr %s266, 4
      %s268 = scalar_lea.vmem %s5, %s267
      %p269 = scmp.lt.s32.totalorder %s18, 1
      %s270 = scalar_select %p269, %s18, 1
      %s271 = smul.addr %s270, 4
      %s272 = scalar_lea.vmem %s6, %s271
      %v273 = vld [vmem:[%s259] sm:$0xff]
      %v274 = vld [vmem:[%s1] sm:$0xf]
      %276 = vset.pattern.permute.xlu0 0
      %277 = vperm.xlu0 %276, %v274
      %v278 = vpop.permute.xlu0 %277
      %v280 = vunpack.c.l.s4 839922192
      %v281 = vunpack.c.0.s8 %v280
      %v282 = vlaneseq
      %v283 = vshrl.u32 %v282, 7
      %v284 = vsub.s32 %v281, %v283
      %v285 = vrot.slane %v278, %v284
      %v287 = vmul.f32 %v273, %v285
      %v288 = vld [vmem:[%s2] sm:$0xf]
      %290 = vset.pattern.permute.xlu0 0
      %291 = vperm.xlu0 %290, %v288
      %v292 = vpop.permute.xlu0 %291
      %v294 = vunpack.c.l.s4 839922192
      %v295 = vunpack.c.0.s8 %v294
      %v296 = vlaneseq
      %v297 = vshrl.u32 %v296, 7
      %v298 = vsub.s32 %v295, %v297
      %v299 = vrot.slane %v292, %v298
      %v301 = vadd.f32 %v287, %v299
      %v302 = vmax.f32 %v301, 0.0
      %v303 = vlaneseq
      %v304 = vand.u32 %v303, 127
      %v305 = vadd.s32 %v304, 128
      %vm306 = vcmp.lt.s32.totalorder %v304, 0
      %v307 = vsub.s32 0, %v304
      %v308 = vsel %vm306, %v307, %v304
      %v309 = vshrl.u32 %v308, 4
      %v310 = vand.u32 %v308, 15
      %v311 = vsub.s32 0, %v310
      %v312 = vsel %vm306, %v311, %v310
      %vm313 = vcmp.lt.s32.totalorder %v305, 0
      %v314 = vsub.s32 0, %v305
      %v315 = vsel %vm313, %v314, %v305
      %v316 = vshrl.u32 %v315, 4
      %v317 = vand.u32 %v315, 15
      %v318 = vsub.s32 0, %v317
      %v319 = vsel %vm313, %v318, %v317
      %vm320 = vcmp.ne.s32.totalorder %v312, 0
      %vm321 = vcmp.ne.s32.totalorder %v319, 0
      %vm322 = vcmp.lt.s32.totalorder %v312, 0
      %vm323 = vcmp.lt.s32.totalorder %v319, 0
      %vm324 = vmand %vm322, %vm320
      %vm325 = vmand %vm323, %vm321
      %v326 = vadd.s32 %v312, 16
      %v327 = vadd.s32 %v319, 16
      %v328 = vsel %vm324, %v326, %v312
      %v329 = vsel %vm325, %v327, %v319
      %330 = vst [vmem:[#allocation2] sm:$0xff] 0.0
      %331 = vst [vmem:[#allocation2 + $0x8] sm:$0xff] 0.0
      %332 = vst [vmem:[#allocation2 + $0x10] sm:$0xff] 0.0
      %333 = vst [vmem:[#allocation2 + $0x18] sm:$0xff] 0.0
      %334 = vst [vmem:[#allocation2 + $0x20] sm:$0xff] 0.0
      %335 = vst [vmem:[#allocation2 + $0x28] sm:$0xff] 0.0
      %336 = vst [vmem:[#allocation2 + $0x30] sm:$0xff] 0.0
      %337 = vst [vmem:[#allocation2 + $0x38] sm:$0xff] 0.0
      %338 = vst [vmem:[#allocation2 + $0x40] sm:$0xf] 0.0
      %339 = vst [vmem:[#allocation2 + $0x48] sm:$0xf] 0.0
      %vm340 = vcmp.ge.s32.totalorder %v328, 1
      %vm341 = vcmp.ge.s32.totalorder %v329, 1
      %v343 = vcombine.high %v302, %v302
      %344 = vrot.lane.b32.xlu0 %v302, 17
      %v345 = vpop.permute.xlu0 %344
      %346 = vrot.lane.b32.xlu0 %v343, 17
      %v347 = vpop.permute.xlu0 %346
      %vm348 = vcmask 138240
      %v349 = vsel %vm348, %v345, %v347
      %v352 = vsel %vm340, %v345, 0.0
      %v353 = vsel %vm341, %v349, 0.0
      %vm354 = vcmask 1043592
      %355 = vst.msk [vmem:[#allocation2] sm:$0xf] %vm354, %v352
      %356 = vst [vmem:[#allocation2 + $0x8] sm:$0xf] %v353
      %v357 = vcombine.low %v302, %v302
      %358 = vrot.lane.b32.xlu0 %v357, 16
      %v359 = vpop.permute.xlu0 %358
      %360 = vrot.lane.b32.xlu0 %v302, 16
      %v361 = vpop.permute.xlu0 %360
      %vm362 = vcmask 130048
      %v363 = vsel %vm362, %v359, %v361
      %vm366 = vcmask 1047684
      %367 = vst.msk [vmem:[#allocation2] sm:$0xf0] %vm366, %v359
      %368 = vst [vmem:[#allocation2 + $0x8] sm:$0xf0] %v363
      %vm369 = vcmp.le.s32.totalorder %v328, 14
      %vm370 = vcmp.le.s32.totalorder %v329, 14
      %371 = vrot.lane.b32.xlu0 %v302, 15
      %v372 = vpop.permute.xlu0 %371
      %373 = vrot.lane.b32.xlu0 %v343, 15
      %v374 = vpop.permute.xlu0 %373
      %vm375 = vcmask 121856
      %v376 = vsel %vm375, %v372, %v374
      %v379 = vsel %vm369, %v372, 0.0
      %v380 = vsel %vm370, %v376, 0.0
      %vm381 = vcmask 1043576
      %382 = vst.msk [vmem:[#allocation2 + $0x10] sm:$0xf] %vm381, %v379
      %383 = vst [vmem:[#allocation2 + $0x18] sm:$0xf] %v380
      %384 = vrot.lane.b32.xlu0 %v302, 1
      %v385 = vpop.permute.xlu0 %384
      %386 = vrot.lane.b32.xlu0 %v343, 1
      %v387 = vpop.permute.xlu0 %386
      %vm388 = vcmask 7168
      %v389 = vsel %vm388, %v385, %v387
      %v392 = vsel %vm340, %v385, 0.0
      %v393 = vsel %vm341, %v389, 0.0
      %v396 = vrot.slane %v392, 4
      %v397 = vrot.slane %v393, 4
      %vm400 = vcmask 1047564
      %401 = vst.msk [vmem:[#allocation2 + $0x10] sm:$0xf0] %vm400, %v396
      %402 = vst [vmem:[#allocation2 + $0x18] sm:$0xf0] %v397
      %404 = vst [vmem:[#allocation2 + $0x20] sm:$0xf] %v302
      %405 = vst [vmem:[#allocation2 + $0x28] sm:$0xf] %v343
      %406 = vrot.lane.b32.xlu0 %v302, 127
      %v407 = vpop.permute.xlu0 %406
      %408 = vrot.lane.b32.xlu0 %v343, 127
      %v409 = vpop.permute.xlu0 %408
      %vm410 = vcmask 1039360
      %v411 = vsel %vm410, %v407, %v409
      %v414 = vsel %vm369, %v411, 0.0
      %v415 = vsel %vm370, %v409, 0.0
      %v418 = vrot.slane %v414, 4
      %v419 = vrot.slane %v415, 4
      %422 = vst [vmem:[#allocation2 + $0x20] sm:$0xf0] %v418
      %vm423 = vcmask 1039364
      %424 = vst.msk [vmem:[#allocation2 + $0x28] sm:$0xf0] %vm423, %v419
      %425 = vrot.lane.b32.xlu0 %v302, 113
      %v426 = vpop.permute.xlu0 %425
      %427 = vrot.lane.b32.xlu0 %v343, 113
      %v428 = vpop.permute.xlu0 %427
      %vm429 = vcmask 924672
      %v430 = vsel %vm429, %v426, %v428
      %v433 = vsel %vm340, %v430, 0.0
      %v434 = vsel %vm341, %v428, 0.0
      %435 = vst [vmem:[#allocation2 + $0x30] sm:$0xf] %v433
      %vm436 = vcmask 920576
      %437 = vst.msk [vmem:[#allocation2 + $0x38] sm:$0xf] %vm436, %v434
      %438 = vrot.lane.b32.xlu0 %v357, 112
      %v439 = vpop.permute.xlu0 %438
      %440 = vrot.lane.b32.xlu0 %v302, 112
      %v441 = vpop.permute.xlu0 %440
      %vm442 = vcmask 916480
      %v443 = vsel %vm442, %v439, %v441
      %446 = vst [vmem:[#allocation2 + $0x30] sm:$0xf0] %v443
      %vm447 = vcmask 916484
      %448 = vst.msk [vmem:[#allocation2 + $0x38] sm:$0xf0] %vm447, %v441
      %449 = vrot.lane.b32.xlu0 %v302, 111
      %v450 = vpop.permute.xlu0 %449
      %451 = vrot.lane.b32.xlu0 %v343, 111
      %v452 = vpop.permute.xlu0 %451
      %vm453 = vcmask 908288
      %v454 = vsel %vm453, %v450, %v452
      %v457 = vsel %vm369, %v454, 0.0
      %v458 = vsel %vm370, %v452, 0.0
      %459 = vst [vmem:[#allocation2 + $0x40] sm:$0xf] %v457
      %vm460 = vcmask 904192
      %461 = vst.msk [vmem:[#allocation2 + $0x48] sm:$0xf] %vm460, %v458
      %v462 = vld [vmem:[%s3] sm:$0xf]
      %v463 = vld [vmem:[#allocation2] sm:$0xff]
      %v464 = vld [vmem:[#allocation2 + $0x8] sm:$0xff]
      %v465 = vld [vmem:[#allocation2 + $0x10] sm:$0xff]
      %v466 = vld [vmem:[#allocation2 + $0x18] sm:$0xff]
      %v467 = vld [vmem:[#allocation2 + $0x20] sm:$0xff]
      %v468 = vld [vmem:[#allocation2 + $0x28] sm:$0xff]
      %v469 = vld [vmem:[#allocation2 + $0x30] sm:$0xff]
      %v470 = vld [vmem:[#allocation2 + $0x38] sm:$0xff]
      %v471 = vld [vmem:[#allocation2 + $0x40] sm:$0xf]
      %v472 = vld [vmem:[#allocation2 + $0x48] sm:$0xf]
      %vm473 = vcmask 293888
      %v475 = vsel %vm473, %v462, 0
      %vm477 = vcmask 1043456
      %v479 = vsel %vm477, %v471, 0
      %v482 = vsel %vm477, %v472, 0
      %484 = vmatprep.subr.mxu0 0.0
      %485 = vmatpush1.msra.mxu0 0.0
      %486 = vmatprep.subr.mxu0 0.0
      %487 = vmatpush1.msra.mxu0 0.0
      %488 = vmatprep.subr.mxu0 0.0
      %489 = vmatpush1.msra.mxu0 0.0
      %490 = vmatprep.subr.mxu0 0.0
      %491 = vmatpush1.msra.mxu0 0.0
      %492 = vmatprep.subr.mxu0 0.0
      %493 = vmatpush1.msra.mxu0 0.0
      %494 = vmatprep.subr.mxu0 0.0
      %495 = vmatpush1.msra.mxu0 0.0
      %496 = vmatprep.subr.mxu0 0.0
      %497 = vmatpush1.msra.mxu0 0.0
      %498 = vmatprep.subr.mxu0 0.0
      %499 = vmatpush1.msra.mxu0 0.0
      %500 = vmatprep.subr.mxu0 0.0
      %501 = vmatpush1.msra.mxu0 0.0
      %502 = vmatprep.subr.mxu0 0.0
      %503 = vmatpush1.msra.mxu0 0.0
      %504 = vmatprep.subr.mxu0 0.0
      %505 = vmatpush1.msra.mxu0 0.0
      %506 = vmatprep.subr.mxu0 %v482
      %507 = vmatpush1.msra.mxu0 %v479
      %508 = vmatprep.subr.mxu0 %v470
      %509 = vmatpush1.msra.mxu0 %v469
      %510 = vmatprep.subr.mxu0 %v468
      %511 = vmatpush1.msra.mxu0 %v467
      %512 = vmatprep.subr.mxu0 %v466
      %513 = vmatpush1.msra.mxu0 %v465
      %514 = vmatprep.subr.mxu0 %v464
      %515 = vmatpush1.msra.mxu0 %v463
      %516 = vmatprep.subr.mxu0 0.0
      %517 = vmatpush2.msra.mxu0 0.0
      %518 = vmatprep.subr.mxu0 0.0
      %519 = vmatpush2.msra.mxu0 0.0
      %520 = vmatprep.subr.mxu0 0.0
      %521 = vmatpush2.msra.mxu0 0.0
      %522 = vmatprep.subr.mxu0 0.0
      %523 = vmatpush2.msra.mxu0 0.0
      %524 = vmatprep.subr.mxu0 0.0
      %525 = vmatpush2.msra.mxu0 0.0
      %526 = vmatprep.subr.mxu0 0.0
      %527 = vmatpush2.msra.mxu0 0.0
      %528 = vmatprep.subr.mxu0 0.0
      %529 = vmatpush2.msra.mxu0 0.0
      %530 = vmatprep.subr.mxu0 0.0
      %531 = vmatpush2.msra.mxu0 0.0
      %532 = vmatprep.subr.mxu0 0.0
      %533 = vmatpush2.msra.mxu0 0.0
      %534 = vmatprep.subr.mxu0 0.0
      %535 = vmatpush2.msra.mxu0 0.0
      %536 = vmatprep.subr.mxu0 0.0
      %537 = vmatpush2.msra.mxu0 0.0
      %538 = vmatprep.subr.mxu0 0.0
      %539 = vmatpush2.msra.mxu0 0.0
      %540 = vmatprep.subr.mxu0 0.0
      %541 = vmatpush2.msra.mxu0 0.0
      %542 = vmatprep.subr.mxu0 0.0
      %543 = vmatpush2.msra.mxu0 0.0
      %544 = vmatprep.subr.mxu0 0.0
      %545 = vmatpush2.msra.mxu0 0.0
      %546 = vmatprep.subr.mxu0 0.0
      %547 = vmatpush2.msra.mxu0 0.0
      %548 = vmatprep.mubr.f32.mxu0 0.0
      %549 = vmatmul.mubr.f32.gmra.mxu0 %v475
      %v550 = vpop.f32.mrf.mxu0
      %v551 = vadd.f32 0.0, %v550
      %v552 = vpop.f32.mrf.mxu0
      %v553 = vadd.f32 0.0, %v552
      %554 = vdwg.mxu0
      %v557 = vcombine.low %v551, %v553
      %559 = vst [vmem:[%s264] sm:$0xff] %v557
      %v560 = vsel %vm477, %v551, 0.0
      %v561 = vsel %vm477, %v553, 0.0
      %v562 = vadd.f32 %v560, %v561
      %563 = vadd.xlane.f32.xlu0 %v562
      %v564 = vpop.xlane.xlu0 %563
      %vm565 = vcmask 3072
      %566 = vst.msk [vmem:[%s268] sm:$0xf] %vm565, %v564
      %v567 = vmul.f32 %v551, %v551
      %v568 = vmul.f32 %v553, %v553
      %v569 = vsel %vm477, %v567, 0.0
      %v570 = vsel %vm477, %v568, 0.0
      %v571 = vadd.f32 %v569, %v570
      %572 = vadd.xlane.f32.xlu0 %v571
      %v573 = vpop.xlane.xlu0 %572
      %574 = vst.msk [vmem:[%s272] sm:$0xf] %vm565, %v573
      %p575 = scmp.lt.s32.totalorder %s18, 1
      %s576 = scalar_select %p575, %s18, 1
      %s577 = smul.addr %s576, 2
      %s578 = smul.addr %s577, 4
      %s579 = scalar_lea.vmem %s4, %s578
      %p580 = scmp.lt.s32.totalorder %s18, 1
      %s581 = scalar_select %p580, %s18, 1
      %s582 = smul.addr %s581, 4
      %s583 = scalar_lea.vmem %s5, %s582
      %p584 = scmp.lt.s32.totalorder %s18, 1
      %s585 = scalar_select %p584, %s18, 1
      %s586 = smul.addr %s585, 4
      %s587 = scalar_lea.vmem %s6, %s586
      // Predicated region
      $region37: #{residual_block.4} parent=35 // pred_check
        %p588 = pneg %p125
      $region38: #{residual_block.4} parent=35 // pred_check_branch
        %590 = sbr.rel (%p588) target = $region40
      $region39: #{residual_block.4} parent=35 // pred_region
        _
      $region40: #{residual_block.4} parent=35 // pred_fallthru
        _
      // Predicated region
      $region41: #{residual_block.4} parent=35 // pred_check
        %p591 = pneg %p151
      $region42: #{residual_block.4} parent=35 // pred_check_branch
        %593 = sbr.rel (%p591) target = $region44
      $region43: #{residual_block.4} parent=35 // pred_region
        _
      $region44: #{residual_block.4} parent=35 // pred_fallthru
        _
      // Predicated region
      $region45: #{residual_block.4} parent=35 // pred_check
        %p594 = pneg %p177
      $region46: #{residual_block.4} parent=35 // pred_check_branch
        %596 = sbr.rel (%p594) target = $region48
      $region47: #{residual_block.4} parent=35 // pred_region
        _
      $region48: #{residual_block.4} parent=35 // pred_fallthru
        _
    $region36: #{residual_block.4} parent=5 // pred_fallthru
      _
    %p597 = scmp.le.s32.totalorder 2, %s13
    // Predicated region
    $region49: #{residual_block.4} parent=5 // pred_check
      %p598 = pneg %p597
    $region50: #{residual_block.4} parent=5 // pred_check_branch
      %600 = sbr.rel (%p598) target = $region52
    $region51: #{residual_block.4} parent=5 // pred_region
      %s601 = ssub.s32 %s13, 2
      // Predicated region
      $region53: #{residual_block.4} parent=51 // pred_check
        %p602 = pneg %p131
      $region54: #{residual_block.4} parent=51 // pred_check_branch
        %604 = sbr.rel (%p602) target = $region56
      $region55: #{residual_block.4} parent=51 // pred_region
        %p605 = scmp.lt.s32.totalorder %s19, 1
        %s606 = scalar_select %p605, %s19, 1
        %s607 = smul.addr %s606, 2
        %s608 = smul.addr %s607, 4
        %s609 = scalar_lea.vmem %s4, %s608
      $region56: #{residual_block.4} parent=51 // pred_fallthru
        _
      // Predicated region
      $region57: #{residual_block.4} parent=51 // pred_check
        %p610 = pneg %p157
      $region58: #{residual_block.4} parent=51 // pred_check_branch
        %612 = sbr.rel (%p610) target = $region60
      $region59: #{residual_block.4} parent=51 // pred_region
        %p613 = scmp.lt.s32.totalorder %s19, 1
        %s614 = scalar_select %p613, %s19, 1
        %s615 = smul.addr %s614, 4
        %s616 = scalar_lea.vmem %s5, %s615
      $region60: #{residual_block.4} parent=51 // pred_fallthru
        _
      // Predicated region
      $region61: #{residual_block.4} parent=51 // pred_check
        %p617 = pneg %p183
      $region62: #{residual_block.4} parent=51 // pred_check_branch
        %619 = sbr.rel (%p617) target = $region64
      $region63: #{residual_block.4} parent=51 // pred_region
        %p620 = scmp.lt.s32.totalorder %s19, 1
        %s621 = scalar_select %p620, %s19, 1
        %s622 = smul.addr %s621, 4
        %s623 = scalar_lea.vmem %s6, %s622
      $region64: #{residual_block.4} parent=51 // pred_fallthru
        _
    $region52: #{residual_block.4} parent=5 // pred_fallthru
      _
  $region6: #{residual_block.4} parent=0 // loop_footer
    %s17 = sadd.s32 1, %s13
  $region7: #{residual_block.4} parent=0 // loop_footer_branch
    %12 = sbr.rel target = $region3
  $region8: #{residual_block.4} parent=0 // loop_exit
    _

</llo_original>
